<compile_context>
chip_gen: v7x
topology: tpu7x:2x2x1
jax: 0.10.0
libtpu: 0.0.40
codegen_flags: <defaults>
</compile_context>

<pallas_src>
import functools

import jax
import jax.numpy as jnp
from jax.experimental import pallas as pl
from jax.experimental.pallas import tpu as pltpu


def _round_up(x, m):
    return (x + m - 1) // m * m


def mlp_kernel(x_ref, w1_ref, b1_ref, w2_ref, b2_ref, w3_ref, b3_ref, o_ref,
               *, num_classes):
    # Cast the streamed input tile to bf16 in-register (no extra HBM pass).
    x = x_ref[...].astype(jnp.bfloat16)

    # --- layer 1: Linear(784 -> 196 [padded to 256]) + ReLU ------------------
    y1 = jnp.dot(x, w1_ref[...], preferred_element_type=jnp.float32)
    y1 = jnp.maximum(y1 + b1_ref[...], 0.0)

    # --- layer 2: Linear(196 -> 49 [padded 256 -> 128]) + ReLU ---------------
    y2 = jnp.dot(y1.astype(jnp.bfloat16), w2_ref[...],
                 preferred_element_type=jnp.float32)
    y2 = jnp.maximum(y2 + b2_ref[...], 0.0)

    # --- layer 3: Linear(49 -> 10 [padded 128 -> 128]) -----------------------
    logits = jnp.dot(y2.astype(jnp.bfloat16), w3_ref[...],
                     preferred_element_type=jnp.float32)
    logits = logits + b3_ref[...]

    # Mask the zero-padded class columns so they contribute nothing (exp -> 0).
    col = jax.lax.broadcasted_iota(jnp.int32, logits.shape, dimension=1)
    logits = jnp.where(col < num_classes, logits, -jnp.inf)

    # --- numerically stable softmax over the last axis -----------------------
    m = jnp.max(logits, axis=-1, keepdims=True)
    e = jnp.exp(logits - m)
    denom = jnp.sum(e, axis=-1, keepdims=True)
    # EUP approximate reciprocal + one Newton step (rel. error ~2^-24).
    r = pl.reciprocal(denom, approx=True)
    r = r * (2.0 - denom * r)
    probs = e * r

    # Store only the real class columns; the masked 10-lane store is free
    # (DMA is the bottleneck, the store slot has enormous slack).
    o_ref[...] = probs[:, :num_classes].astype(o_ref.dtype)


def prepare_params(w1, b1, w2, b2, w3, b3):
    """One-time padding/cast of parameters to lane-aligned, resident layout.

    Call once at init and reuse the result for every forward call so the
    per-call wrapper HLO is just the pallas_call itself.
    """
    in_features, h1 = w1.shape
    h2 = w2.shape[1]
    num_classes = w3.shape[1]

    h1p = _round_up(h1, 128)
    h2p = _round_up(h2, 128)
    ncp = _round_up(num_classes, 128)

    w1p = jnp.zeros((in_features, h1p), jnp.bfloat16).at[:, :h1].set(
        w1.astype(jnp.bfloat16))
    w2p = jnp.zeros((h1p, h2p), jnp.bfloat16).at[:h1, :h2].set(
        w2.astype(jnp.bfloat16))
    w3p = jnp.zeros((h2p, ncp), jnp.bfloat16).at[:h2, :num_classes].set(
        w3.astype(jnp.bfloat16))
    b1p = jnp.zeros((1, h1p), jnp.float32).at[:, :h1].set(b1.astype(jnp.float32))
    b2p = jnp.zeros((1, h2p), jnp.float32).at[:, :h2].set(b2.astype(jnp.float32))
    b3p = jnp.zeros((1, ncp), jnp.float32).at[:, :num_classes].set(
        b3.astype(jnp.float32))
    return (w1p, b1p, w2p, b2p, w3p, b3p), num_classes


def mlp_forward(x, padded_params, num_classes, *, block_batch=2048):
    """Fused MLP forward: batch-streamed Pallas kernel with resident weights.

    block_batch=2048 keeps 2x(tb,784) f32 input buffers + resident bf16
    weights + tiny (tb,10) output buffers at ~14 MiB of VMEM — within the
    explicit 32 MiB limit on all generations (v5e/v6e/v7x).  On v6e it can be
    raised to 4096-8192 with a larger vmem_limit_bytes; do not exceed ~2048 on
    v7x without raising the limit (64 MiB physical VMEM per TensorCore).
    """
    w1p, b1p, w2p, b2p, w3p, b3p = padded_params
    B, in_features = x.shape
    h1p = w1p.shape[1]
    h2p = w2p.shape[1]
    ncp = w3p.shape[1]

    # Batch tile: large enough to amortize per-step pipeline overhead, and
    # sized so the grid has >=2 steps whenever B allows (v7x has 2 TCs).
    tb = max(8, min(block_batch, _round_up(pl.cdiv(B, 2), 8)))
    grid = (pl.cdiv(B, tb),)

    def const_spec(shape):
        # Same block every grid step -> DMA'd once, stays resident in VMEM.
        return pl.BlockSpec(shape, lambda i: (0, 0))

    return pl.pallas_call(
        functools.partial(mlp_kernel, num_classes=num_classes),
        out_shape=jax.ShapeDtypeStruct((B, num_classes), jnp.float32),
        grid=grid,
        in_specs=[
            pl.BlockSpec((tb, in_features), lambda i: (i, 0)),   # x tiles stream
            const_spec((in_features, h1p)), const_spec((1, h1p)),
            const_spec((h1p, h2p)),         const_spec((1, h2p)),
            const_spec((h2p, ncp)),         const_spec((1, ncp)),
        ],
        out_specs=pl.BlockSpec((tb, num_classes), lambda i: (i, 0)),
        compiler_params=pltpu.CompilerParams(
            dimension_semantics=("parallel",),
            vmem_limit_bytes=32 << 20),
    )(x, w1p, b1p, w2p, b2p, w3p, b3p)


def init_params(key, input_size, h1, h2, num_classes):
    """Deterministic init matching nn.Linear's uniform(-1/sqrt(fan_in), ...)."""
    ks = jax.random.split(key, 6)

    def linear(kw, kb, fan_in, fan_out):
        bound = 1.0 / jnp.sqrt(fan_in)
        w = jax.random.uniform(kw, (fan_in, fan_out), jnp.float32, -bound, bound)
        b = jax.random.uniform(kb, (1, fan_out), jnp.float32, -bound, bound)
        return w, b

    w1, b1 = linear(ks[0], ks[1], input_size, h1)
    w2, b2 = linear(ks[2], ks[3], h1, h2)
    w3, b3 = linear(ks[4], ks[5], h2, num_classes)
    return w1, b1, w2, b2, w3, b3


if __name__ == "__main__":
    input_size = 28 * 28          # 784
    h1 = input_size // 4          # 196
    h2 = h1 // 4                  # 49
    num_classes = 10
    batch = 100                   # matches the module's batch_size

    key = jax.random.PRNGKey(0)
    kx, kp = jax.random.split(key)

    x = jax.random.normal(kx, (batch, input_size), jnp.float32)
    raw_params = init_params(kp, input_size, h1, h2, num_classes)

    # One-time parameter preparation (padding + bf16 cast), reused per forward.
    padded_params, nc = prepare_params(*raw_params)

    y = mlp_forward(x, padded_params, nc)
    y = jax.block_until_ready(y)

    # Pure-JAX f32 reference for correctness.
    w1, b1, w2, b2, w3, b3 = raw_params
    r1 = jnp.maximum(x @ w1 + b1, 0.0)
    r2 = jnp.maximum(r1 @ w2 + b2, 0.0)
    ref = jax.nn.softmax(r2 @ w3 + b3, axis=-1)

    assert y.shape == (batch, num_classes)
    assert bool(jnp.all(jnp.isfinite(y)))
    assert jnp.allclose(jnp.sum(y, axis=-1), 1.0, atol=1e-4)       # rows sum to 1
    assert jnp.allclose(y, ref, atol=3e-2)                         # bf16-matmul tolerance

    print("KERNEL_OK")
</pallas_src>

<mosaic_0001>
module attributes {stable_mosaic.version = 11 : i64} {
  func.func @mlp_kernel(%arg0: i32, %arg1: memref<56x784xf32, #tpu.memory_space<vmem>>, %arg2: memref<784x256xbf16, #tpu.memory_space<vmem>>, %arg3: memref<1x256xf32, #tpu.memory_space<vmem>>, %arg4: memref<256x128xbf16, #tpu.memory_space<vmem>>, %arg5: memref<1x128xf32, #tpu.memory_space<vmem>>, %arg6: memref<128x128xbf16, #tpu.memory_space<vmem>>, %arg7: memref<1x128xf32, #tpu.memory_space<vmem>>, %arg8: memref<56x10xf32, #tpu.memory_space<vmem>>) attributes {dimension_semantics = [#tpu.dimension_semantics<parallel>], iteration_bounds = array<i64: 2>, scalar_prefetch = 0 : i64, scratch_operands = 0 : i64, tpu.core_type = #tpu.core_type<tc>, window_params = [{transform_indices = @transform_0, window_bounds = array<i64: 56, 784>}, {pipeline_mode = #tpu.pipeline_mode<synchronous>, transform_indices = @transform_1, window_bounds = array<i64: 784, 256>}, {pipeline_mode = #tpu.pipeline_mode<synchronous>, transform_indices = @transform_2, window_bounds = array<i64: 1, 256>}, {pipeline_mode = #tpu.pipeline_mode<synchronous>, transform_indices = @transform_3, window_bounds = array<i64: 256, 128>}, {pipeline_mode = #tpu.pipeline_mode<synchronous>, transform_indices = @transform_4, window_bounds = array<i64: 1, 128>}, {pipeline_mode = #tpu.pipeline_mode<synchronous>, transform_indices = @transform_5, window_bounds = array<i64: 128, 128>}, {pipeline_mode = #tpu.pipeline_mode<synchronous>, transform_indices = @transform_6, window_bounds = array<i64: 1, 128>}, {transform_indices = @transform_7, window_bounds = array<i64: 56, 10>}]} {
    %c0 = arith.constant 0 : index
    %c0_0 = arith.constant 0 : index
    %0 = vector.load %arg1[%c0, %c0_0] : memref<56x784xf32, #tpu.memory_space<vmem>>, vector<56x784xf32>
    %1 = arith.truncf %0 : vector<56x784xf32> to vector<56x784xbf16>
    %c0_1 = arith.constant 0 : index
    %c0_2 = arith.constant 0 : index
    %2 = vector.load %arg2[%c0_1, %c0_2] : memref<784x256xbf16, #tpu.memory_space<vmem>>, vector<784x256xbf16>
    %cst = arith.constant dense<0.000000e+00> : vector<56x256xf32>
    %3 = tpu.matmul %1, %2, %cst {dimension_numbers = #tpu.dot_dimension_numbers<[1], [0], [0], [1], [0, 0, 1, 1], [], []>} : vector<56x784xbf16>, vector<784x256xbf16>, vector<56x256xf32> -> vector<56x256xf32>
    %c0_3 = arith.constant 0 : index
    %c0_4 = arith.constant 0 : index
    %4 = vector.load %arg3[%c0_3, %c0_4] : memref<1x256xf32, #tpu.memory_space<vmem>>, vector<1x256xf32>
    %5 = vector.broadcast %4 : vector<1x256xf32> to vector<56x256xf32>
    %6 = arith.addf %3, %5 : vector<56x256xf32>
    %cst_5 = arith.constant 0.000000e+00 : f32
    %7 = vector.broadcast %cst_5 : f32 to vector<56x256xf32>
    %8 = arith.maximumf %6, %7 : vector<56x256xf32>
    %9 = arith.truncf %8 : vector<56x256xf32> to vector<56x256xbf16>
    %c0_6 = arith.constant 0 : index
    %c0_7 = arith.constant 0 : index
    %10 = vector.load %arg4[%c0_6, %c0_7] : memref<256x128xbf16, #tpu.memory_space<vmem>>, vector<256x128xbf16>
    %cst_8 = arith.constant dense<0.000000e+00> : vector<56x128xf32>
    %11 = tpu.matmul %9, %10, %cst_8 {dimension_numbers = #tpu.dot_dimension_numbers<[1], [0], [0], [1], [0, 0, 1, 1], [], []>} : vector<56x256xbf16>, vector<256x128xbf16>, vector<56x128xf32> -> vector<56x128xf32>
    %c0_9 = arith.constant 0 : index
    %c0_10 = arith.constant 0 : index
    %12 = vector.load %arg5[%c0_9, %c0_10] : memref<1x128xf32, #tpu.memory_space<vmem>>, vector<1x128xf32>
    %13 = vector.broadcast %12 : vector<1x128xf32> to vector<56x128xf32>
    %14 = arith.addf %11, %13 : vector<56x128xf32>
    %cst_11 = arith.constant 0.000000e+00 : f32
    %15 = vector.broadcast %cst_11 : f32 to vector<56x128xf32>
    %16 = arith.maximumf %14, %15 : vector<56x128xf32>
    %17 = arith.truncf %16 : vector<56x128xf32> to vector<56x128xbf16>
    %c0_12 = arith.constant 0 : index
    %c0_13 = arith.constant 0 : index
    %18 = vector.load %arg6[%c0_12, %c0_13] : memref<128x128xbf16, #tpu.memory_space<vmem>>, vector<128x128xbf16>
    %cst_14 = arith.constant dense<0.000000e+00> : vector<56x128xf32>
    %19 = tpu.matmul %17, %18, %cst_14 {dimension_numbers = #tpu.dot_dimension_numbers<[1], [0], [0], [1], [0, 0, 1, 1], [], []>} : vector<56x128xbf16>, vector<128x128xbf16>, vector<56x128xf32> -> vector<56x128xf32>
    %c0_15 = arith.constant 0 : index
    %c0_16 = arith.constant 0 : index
    %20 = vector.load %arg7[%c0_15, %c0_16] : memref<1x128xf32, #tpu.memory_space<vmem>>, vector<1x128xf32>
    %21 = vector.broadcast %20 : vector<1x128xf32> to vector<56x128xf32>
    %22 = arith.addf %19, %21 : vector<56x128xf32>
    %23 = tpu.iota {dimensions = array<i32: 1>} : vector<56x128xi32>
    %c10_i32 = arith.constant 10 : i32
    %24 = vector.broadcast %c10_i32 : i32 to vector<56x128xi32>
    %25 = arith.cmpi slt, %23, %24 : vector<56x128xi32>
    %cst_17 = arith.constant 0xFF800000 : f32
    %26 = vector.broadcast %cst_17 : f32 to vector<56x128xf32>
    %27 = arith.select %25, %22, %26 : vector<56x128xi1>, vector<56x128xf32>
    %cst_18 = arith.constant dense<0xFF800000> : vector<56xf32>
    %28 = vector.multi_reduction <maximumf>, %27, %cst_18 [1] : vector<56x128xf32> to vector<56xf32>
    %29 = vector.shape_cast %28 : vector<56xf32> to vector<56x1xf32>
    %30 = vector.broadcast %29 : vector<56x1xf32> to vector<56x128xf32>
    %31 = arith.subf %27, %30 : vector<56x128xf32>
    %32 = math.exp %31 : vector<56x128xf32>
    %cst_19 = arith.constant dense<0.000000e+00> : vector<56xf32>
    %33 = vector.multi_reduction <add>, %32, %cst_19 [1] : vector<56x128xf32> to vector<56xf32>
    %34 = vector.shape_cast %33 : vector<56xf32> to vector<56x1xf32>
    %35 = tpu.reciprocal %34 {approx = true} : vector<56x1xf32> -> vector<56x1xf32>
    %36 = arith.mulf %34, %35 : vector<56x1xf32>
    %cst_20 = arith.constant 2.000000e+00 : f32
    %37 = vector.broadcast %cst_20 : f32 to vector<56x1xf32>
    %38 = arith.subf %37, %36 : vector<56x1xf32>
    %39 = arith.mulf %35, %38 : vector<56x1xf32>
    %40 = vector.broadcast %39 : vector<56x1xf32> to vector<56x128xf32>
    %41 = arith.mulf %32, %40 : vector<56x128xf32>
    %42 = vector.extract_strided_slice %41 {offsets = [0, 0], sizes = [56, 10], strides = [1, 1]} : vector<56x128xf32> to vector<56x10xf32>
    %c0_21 = arith.constant 0 : index
    %c0_22 = arith.constant 0 : index
    %43 = vector.load %arg8[%c0_21, %c0_22] : memref<56x10xf32, #tpu.memory_space<vmem>>, vector<56x10xf32>
    tpu.vector_store %arg8[%c0_21, %c0_22], %42 {strides = array<i32>} : memref<56x10xf32, #tpu.memory_space<vmem>>, vector<56x10xf32>,
    return
  }
  func.func @transform_0(%arg0: i32) -> (i32, i32) {
    %c0_i32 = arith.constant 0 : i32
    %c0_i32_0 = arith.constant 0 : i32
    return %arg0, %c0_i32 : i32, i32
  }
  func.func @transform_1(%arg0: i32) -> (i32, i32) {
    %c0_i32 = arith.constant 0 : i32
    %c0_i32_0 = arith.constant 0 : i32
    %c0_i32_1 = arith.constant 0 : i32
    return %c0_i32, %c0_i32_0 : i32, i32
  }
  func.func @transform_2(%arg0: i32) -> (i32, i32) {
    %c0_i32 = arith.constant 0 : i32
    %c0_i32_0 = arith.constant 0 : i32
    %c0_i32_1 = arith.constant 0 : i32
    return %c0_i32, %c0_i32_0 : i32, i32
  }
  func.func @transform_3(%arg0: i32) -> (i32, i32) {
    %c0_i32 = arith.constant 0 : i32
    %c0_i32_0 = arith.constant 0 : i32
    %c0_i32_1 = arith.constant 0 : i32
    return %c0_i32, %c0_i32_0 : i32, i32
  }
  func.func @transform_4(%arg0: i32) -> (i32, i32) {
    %c0_i32 = arith.constant 0 : i32
    %c0_i32_0 = arith.constant 0 : i32
    %c0_i32_1 = arith.constant 0 : i32
    return %c0_i32, %c0_i32_0 : i32, i32
  }
  func.func @transform_5(%arg0: i32) -> (i32, i32) {
    %c0_i32 = arith.constant 0 : i32
    %c0_i32_0 = arith.constant 0 : i32
    %c0_i32_1 = arith.constant 0 : i32
    return %c0_i32, %c0_i32_0 : i32, i32
  }
  func.func @transform_6(%arg0: i32) -> (i32, i32) {
    %c0_i32 = arith.constant 0 : i32
    %c0_i32_0 = arith.constant 0 : i32
    %c0_i32_1 = arith.constant 0 : i32
    return %c0_i32, %c0_i32_0 : i32, i32
  }
  func.func @transform_7(%arg0: i32) -> (i32, i32) {
    %c0_i32 = arith.constant 0 : i32
    %c0_i32_0 = arith.constant 0 : i32
    return %arg0, %c0_i32 : i32, i32
  }
}

</mosaic_0001>

<llo_original>
// kernel: tpu_custom_call.1
$region0: #{tpu_custom_call.1}
  #allocation0 [shape = 'u32[]', space=smem, size = 0x4, offset = 0x4, fixed_abs, tag = 'smem constant byte address 0x4 - core index']
  #allocation1 [shape = 'u32[144,128]{1,0:T(1,128)}', space=vmem, size = 0x12000, scoped, tag = 'internal scratch']
  %s0 = inlined_call_operand.hbm [shape: f32[100,784], index: 0, kind: input, shape index: {}]
  %s1 = inlined_call_operand.hbm [shape: bf16[784,256], index: 1, kind: input, shape index: {}]
  %s2 = inlined_call_operand.vmem [shape: f32[1,256], index: 2, kind: input, shape index: {}]
  %s3 = inlined_call_operand.hbm [shape: bf16[256,128], index: 3, kind: input, shape index: {}]
  %s4 = inlined_call_operand.vmem [shape: f32[1,128], index: 4, kind: input, shape index: {}]
  %s5 = inlined_call_operand.hbm [shape: bf16[128,128], index: 5, kind: input, shape index: {}]
  %s6 = inlined_call_operand.vmem [shape: f32[1,128], index: 6, kind: input, shape index: {}]
  %s7 = inlined_call_operand.vmem [shape: f32[100,10], index: 7, kind: output, shape index: {}]
  %s8 = sld [smem:[#allocation0]]
  $region125: #{tpu_custom_call.1} parent=0
    _
  %s10 = ssub.s32 1, %s8
  %s11 = scalar_select 0, %s10, %s8
  $region1: #{tpu_custom_call.1} parent=0
    #allocation2 [shape = 'u8[401408]{0}', space=vmem, size = 0x62000, scoped, tag = 'input window, operand 0']
    #allocation3 [shape = 's32[2]{0}', space=sflag, size = 0x8, scoped, tag = 'scoped memory for tpu_custom_call.1']
    #allocation4 [shape = 'u8[401408]{0}', space=vmem, size = 0x62000, scoped, tag = 'input window, operand 1, single buffered']
    #allocation5 [shape = 's32[1]{0}', space=sflag, size = 0x4, scoped, tag = 'scoped memory for tpu_custom_call.1']
    #allocation6 [shape = 'u8[65536]{0}', space=vmem, size = 0x10000, scoped, tag = 'input window, operand 3, single buffered']
    #allocation7 [shape = 'u8[32768]{0}', space=vmem, size = 0x8000, scoped, tag = 'input window, operand 5, single buffered']
    #allocation8 [shape = 's32[1]{0}', space=sflag, size = 0x4, scoped, tag = 'scoped memory for tpu_custom_call.1']
    #allocation9 [shape = 'u8[57344]{0}', space=vmem, size = 0xe000, scoped, tag = 'output window, operand 0']
    %12 = vsyncpa [#allocation3], 0
    %s13 = scalar_lea.sflag [#allocation3], 1
    %14 = vsyncpa %s13, 0
    %15 = vsyncpa [#allocation5], 0
    %16 = vsyncpa [#allocation8], 0
    loop: start=0, step=1, limit=4
    $region2: #{tpu_custom_call.1} parent=1 // loop_pre_header
      _
    $region3: #{tpu_custom_call.1} parent=1 // loop_header
      %s18 = sphi 0, %s22
      %p19 = scmp.ge.s32.totalorder %s18, 4
      %s28 = sphi 0, %s30
      %s31 = sphi 0, %s28
      %s32 = sphi 0, %s31
      %s48 = sphi 0, %s32
      %s52 = sphi 0, %s52
      %s54 = sphi 0, %s52
      %s55 = sphi 0, %s54
      %s69 = sphi 0, %s55
      %s73 = sphi 0, %s73
      %s75 = sphi 0, %s73
      %s76 = sphi 0, %s75
      %s90 = sphi 0, %s76
      %s94 = sphi 0, %s94
      %s96 = sphi 0, %s94
      %s97 = sphi 0, %s96
      %s111 = sphi 0, %s97
      %s115 = sphi 0, %s115
      %s117 = sphi 0, %s115
      %s118 = sphi 0, %s117
      %s132 = sphi 0, %s118
      %s136 = sphi 0, %s136
      %s138 = sphi 0, %s136
      %s139 = sphi 0, %s138
      %s153 = sphi 0, %s139
      %s157 = sphi 0, %s157
      %s159 = sphi 0, %s157
      %s160 = sphi 0, %s159
      %s174 = sphi 0, %s160
      %s180 = sphi 0, %s182
      %s183 = sphi 0, %s180
      %s184 = sphi 0, %s183
      %s200 = sphi 0, %s184
    $region4: #{tpu_custom_call.1} parent=1 // loop_header_branch
      %21 = sbr.rel (%p19) target = $region8
    $region5: #{tpu_custom_call.1} parent=1 // loop_body
      %s23 = ssub.s32 %s18, 1
      %s24 = ssub.s32 %s18, 2
      %s25 = sadd.s32 %s18, 1
      %s26 = ssub.s32 %s18, %s25
      %p27 = scmp.eq.s32.totalorder %s26, 0
      %s29 = sadd.s32 %s28, 1
      %s30 = scalar_select %p27, %s28, %s29
      %p33 = pneg %p27
      %p34 = scmp.eq.s32.totalorder %s18, 1
      %p35 = por %p33, %p34
      %p36 = scmp.ne.s32.totalorder %s28, %s31
      %p37 = scmp.eq.s32.totalorder %s18, 0
      %p38 = por %p36, %p37
      %p39 = scmp.ne.s32.totalorder %s28, %s31
      %p40 = scmp.eq.s32.totalorder %s23, 1
      %p41 = por %p39, %p40
      %p42 = scmp.ne.s32.totalorder %s31, %s32
      %p43 = scmp.eq.s32.totalorder %s23, 0
      %p44 = por %p42, %p43
      %p45 = scmp.ne.s32.totalorder %s31, %s32
      %p46 = scmp.eq.s32.totalorder %s24, 1
      %p47 = por %p45, %p46
      %p49 = scmp.ne.s32.totalorder %s32, %s48
      %p50 = scmp.eq.s32.totalorder %s24, 0
      %p51 = por %p49, %p50
      %s53 = sadd.s32 %s52, 1
      %p56 = scmp.eq.s32.totalorder %s18, 1
      %p57 = scmp.ne.s32.totalorder %s52, %s54
      %p58 = scmp.eq.s32.totalorder %s18, 0
      %p59 = por %p57, %p58
      %p60 = scmp.ne.s32.totalorder %s52, %s54
      %p61 = scmp.eq.s32.totalorder %s23, 1
      %p62 = por %p60, %p61
      %p63 = scmp.ne.s32.totalorder %s54, %s55
      %p64 = scmp.eq.s32.totalorder %s23, 0
      %p65 = por %p63, %p64
      %p66 = scmp.ne.s32.totalorder %s54, %s55
      %p67 = scmp.eq.s32.totalorder %s24, 1
      %p68 = por %p66, %p67
      %p70 = scmp.ne.s32.totalorder %s55, %s69
      %p71 = scmp.eq.s32.totalorder %s24, 0
      %p72 = por %p70, %p71
      %s74 = sadd.s32 %s73, 1
      %p77 = scmp.eq.s32.totalorder %s18, 1
      %p78 = scmp.ne.s32.totalorder %s73, %s75
      %p79 = scmp.eq.s32.totalorder %s18, 0
      %p80 = por %p78, %p79
      %p81 = scmp.ne.s32.totalorder %s73, %s75
      %p82 = scmp.eq.s32.totalorder %s23, 1
      %p83 = por %p81, %p82
      %p84 = scmp.ne.s32.totalorder %s75, %s76
      %p85 = scmp.eq.s32.totalorder %s23, 0
      %p86 = por %p84, %p85
      %p87 = scmp.ne.s32.totalorder %s75, %s76
      %p88 = scmp.eq.s32.totalorder %s24, 1
      %p89 = por %p87, %p88
      %p91 = scmp.ne.s32.totalorder %s76, %s90
      %p92 = scmp.eq.s32.totalorder %s24, 0
      %p93 = por %p91, %p92
      %s95 = sadd.s32 %s94, 1
      %p98 = scmp.eq.s32.totalorder %s18, 1
      %p99 = scmp.ne.s32.totalorder %s94, %s96
      %p100 = scmp.eq.s32.totalorder %s18, 0
      %p101 = por %p99, %p100
      %p102 = scmp.ne.s32.totalorder %s94, %s96
      %p103 = scmp.eq.s32.totalorder %s23, 1
      %p104 = por %p102, %p103
      %p105 = scmp.ne.s32.totalorder %s96, %s97
      %p106 = scmp.eq.s32.totalorder %s23, 0
      %p107 = por %p105, %p106
      %p108 = scmp.ne.s32.totalorder %s96, %s97
      %p109 = scmp.eq.s32.totalorder %s24, 1
      %p110 = por %p108, %p109
      %p112 = scmp.ne.s32.totalorder %s97, %s111
      %p113 = scmp.eq.s32.totalorder %s24, 0
      %p114 = por %p112, %p113
      %s116 = sadd.s32 %s115, 1
      %p119 = scmp.eq.s32.totalorder %s18, 1
      %p120 = scmp.ne.s32.totalorder %s115, %s117
      %p121 = scmp.eq.s32.totalorder %s18, 0
      %p122 = por %p120, %p121
      %p123 = scmp.ne.s32.totalorder %s115, %s117
      %p124 = scmp.eq.s32.totalorder %s23, 1
      %p125 = por %p123, %p124
      %p126 = scmp.ne.s32.totalorder %s117, %s118
      %p127 = scmp.eq.s32.totalorder %s23, 0
      %p128 = por %p126, %p127
      %p129 = scmp.ne.s32.totalorder %s117, %s118
      %p130 = scmp.eq.s32.totalorder %s24, 1
      %p131 = por %p129, %p130
      %p133 = scmp.ne.s32.totalorder %s118, %s132
      %p134 = scmp.eq.s32.totalorder %s24, 0
      %p135 = por %p133, %p134
      %s137 = sadd.s32 %s136, 1
      %p140 = scmp.eq.s32.totalorder %s18, 1
      %p141 = scmp.ne.s32.totalorder %s136, %s138
      %p142 = scmp.eq.s32.totalorder %s18, 0
      %p143 = por %p141, %p142
      %p144 = scmp.ne.s32.totalorder %s136, %s138
      %p145 = scmp.eq.s32.totalorder %s23, 1
      %p146 = por %p144, %p145
      %p147 = scmp.ne.s32.totalorder %s138, %s139
      %p148 = scmp.eq.s32.totalorder %s23, 0
      %p149 = por %p147, %p148
      %p150 = scmp.ne.s32.totalorder %s138, %s139
      %p151 = scmp.eq.s32.totalorder %s24, 1
      %p152 = por %p150, %p151
      %p154 = scmp.ne.s32.totalorder %s139, %s153
      %p155 = scmp.eq.s32.totalorder %s24, 0
      %p156 = por %p154, %p155
      %s158 = sadd.s32 %s157, 1
      %p161 = scmp.eq.s32.totalorder %s18, 1
      %p162 = scmp.ne.s32.totalorder %s157, %s159
      %p163 = scmp.eq.s32.totalorder %s18, 0
      %p164 = por %p162, %p163
      %p165 = scmp.ne.s32.totalorder %s157, %s159
      %p166 = scmp.eq.s32.totalorder %s23, 1
      %p167 = por %p165, %p166
      %p168 = scmp.ne.s32.totalorder %s159, %s160
      %p169 = scmp.eq.s32.totalorder %s23, 0
      %p170 = por %p168, %p169
      %p171 = scmp.ne.s32.totalorder %s159, %s160
      %p172 = scmp.eq.s32.totalorder %s24, 1
      %p173 = por %p171, %p172
      %p175 = scmp.ne.s32.totalorder %s160, %s174
      %p176 = scmp.eq.s32.totalorder %s24, 0
      %p177 = por %p175, %p176
      %s178 = ssub.s32 %s18, %s25
      %p179 = scmp.eq.s32.totalorder %s178, 0
      %s181 = sadd.s32 %s180, 1
      %s182 = scalar_select %p179, %s180, %s181
      %p185 = pneg %p179
      %p186 = scmp.eq.s32.totalorder %s18, 1
      %p187 = por %p185, %p186
      %p188 = scmp.ne.s32.totalorder %s180, %s183
      %p189 = scmp.eq.s32.totalorder %s18, 0
      %p190 = por %p188, %p189
      %p191 = scmp.ne.s32.totalorder %s180, %s183
      %p192 = scmp.eq.s32.totalorder %s23, 1
      %p193 = por %p191, %p192
      %p194 = scmp.ne.s32.totalorder %s183, %s184
      %p195 = scmp.eq.s32.totalorder %s23, 0
      %p196 = por %p194, %p195
      %p197 = scmp.ne.s32.totalorder %s183, %s184
      %p198 = scmp.eq.s32.totalorder %s24, 1
      %p199 = por %p197, %p198
      %p201 = scmp.ne.s32.totalorder %s184, %s200
      %p202 = scmp.eq.s32.totalorder %s24, 0
      %p203 = por %p201, %p202
      %p204 = scmp.le.s32.totalorder 1, %s18
      %p205 = scmp.lt.s32.totalorder %s18, 3
      %p206 = pnand %p204, %p205
      %p207 = pneg %p206
      // Predicated region
      $region9: #{tpu_custom_call.1} parent=5 // pred_check
        _
      $region10: #{tpu_custom_call.1} parent=5 // pred_check_branch
        %209 = sbr.rel (%p206) target = $region12
      $region11: #{tpu_custom_call.1} parent=5 // pred_region
        %s210 = ssub.s32 %s18, 1
        // Predicated region
        $region13: #{tpu_custom_call.1} parent=11 // pred_check
          %p211 = pneg %p65
        $region14: #{tpu_custom_call.1} parent=11 // pred_check_branch
          %213 = sbr.rel (%p211) target = $region16
        $region15: #{tpu_custom_call.1} parent=11 // pred_region
          %s215 = ssub.s32 12544, 12544
          %216 = vsyncadd [#allocation5], %s215
          %s217 = sshll.u32 [#allocation4], 4
          %s218 = int_to_ptr.vmem [resolvable:$true] %s217
          %223 = dma.hbm_to_vmem [thread:$0]  %s1, 12544, %s218, [#allocation5], 128, 128, 8
        $region16: #{tpu_custom_call.1} parent=11 // pred_fallthru
          _
        // Predicated region
        $region17: #{tpu_custom_call.1} parent=11 // pred_check
          %p224 = pneg %p86
        $region18: #{tpu_custom_call.1} parent=11 // pred_check_branch
          %226 = sbr.rel (%p224) target = $region20
        $region19: #{tpu_custom_call.1} parent=11 // pred_region
          _
        $region20: #{tpu_custom_call.1} parent=11 // pred_fallthru
          _
        // Predicated region
        $region21: #{tpu_custom_call.1} parent=11 // pred_check
          %p227 = pneg %p107
        $region22: #{tpu_custom_call.1} parent=11 // pred_check_branch
          %229 = sbr.rel (%p227) target = $region24
        $region23: #{tpu_custom_call.1} parent=11 // pred_region
          %s231 = ssub.s32 2048, 2048
          %232 = vsyncadd [#allocation5], %s231
          %s233 = sshll.u32 [#allocation6], 4
          %s234 = int_to_ptr.vmem [resolvable:$true] %s233
          %239 = dma.hbm_to_vmem [thread:$0]  %s3, 2048, %s234, [#allocation5], 64, 64, 4
        $region24: #{tpu_custom_call.1} parent=11 // pred_fallthru
          _
        // Predicated region
        $region25: #{tpu_custom_call.1} parent=11 // pred_check
          %p240 = pneg %p128
        $region26: #{tpu_custom_call.1} parent=11 // pred_check_branch
          %242 = sbr.rel (%p240) target = $region28
        $region27: #{tpu_custom_call.1} parent=11 // pred_region
          _
        $region28: #{tpu_custom_call.1} parent=11 // pred_fallthru
          _
        // Predicated region
        $region29: #{tpu_custom_call.1} parent=11 // pred_check
          %p243 = pneg %p149
        $region30: #{tpu_custom_call.1} parent=11 // pred_check_branch
          %245 = sbr.rel (%p243) target = $region32
        $region31: #{tpu_custom_call.1} parent=11 // pred_region
          %s247 = ssub.s32 1024, 1024
          %248 = vsyncadd [#allocation8], %s247
          %s249 = sshll.u32 [#allocation7], 4
          %s250 = int_to_ptr.vmem [resolvable:$true] %s249
          %255 = dma.hbm_to_vmem [thread:$0]  %s5, 1024, %s250, [#allocation8], 64, 64, 4
        $region32: #{tpu_custom_call.1} parent=11 // pred_fallthru
          _
        // Predicated region
        $region33: #{tpu_custom_call.1} parent=11 // pred_check
          %p256 = pneg %p170
        $region34: #{tpu_custom_call.1} parent=11 // pred_check_branch
          %258 = sbr.rel (%p256) target = $region36
        $region35: #{tpu_custom_call.1} parent=11 // pred_region
          _
        $region36: #{tpu_custom_call.1} parent=11 // pred_fallthru
          _
      $region12: #{tpu_custom_call.1} parent=5 // pred_fallthru
        _
      %p259 = scmp.lt.s32.totalorder %s18, 2
      // Predicated region
      $region37: #{tpu_custom_call.1} parent=5 // pred_check
        %p260 = pneg %p259
      $region38: #{tpu_custom_call.1} parent=5 // pred_check_branch
        %262 = sbr.rel (%p260) target = $region40
      $region39: #{tpu_custom_call.1} parent=5 // pred_region
        // Predicated region
        $region41: #{tpu_custom_call.1} parent=39 // pred_check
          %p263 = pneg %p38
        $region42: #{tpu_custom_call.1} parent=39 // pred_check_branch
          %265 = sbr.rel (%p263) target = $region44
        $region43: #{tpu_custom_call.1} parent=39 // pred_region
          %s266 = sand.u32 %s28, 1
          %s267 = scalar_lea.sflag [#allocation3], %s266
          %s268 = sand.u32 %s28, 1
          %s269 = smul.addr %s268, 392
          %s270 = scalar_lea.vmem [#allocation2], %s269
          %s271 = smul.u32 7, %s18
          %s272 = ssub.s32 13, %s271
          %p273 = scmp.lt.s32.totalorder %s272, 7
          %s274 = scalar_select %p273, %s272, 7
          %s275 = smul.u32 128, %s274
          %s276 = smul.u32 %s275, 7
          %s278 = ssub.s32 6272, %s276
          %279 = vsyncadd %s267, %s278
          %p280 = scmp.ne.s32.totalorder 0, %s276
          %s281 = smul.addr %s271, 7
          %s282 = smul.addr %s281, 128
          %s283 = scalar_lea.hbm %s0, %s282
          %s284 = smul.u32 56, %s274
          %s285 = sshll.u32 %s270, 4
          %s286 = int_to_ptr.vmem [resolvable:$true] %s285
          %s287 = sshll.u32 %s284, 4
          %291 = dma.hbm_to_vmem [thread:$0]  (%p280), %s283, %s287, %s286, %s267, 896, 896, 56
        $region44: #{tpu_custom_call.1} parent=39 // pred_fallthru
          _
      $region40: #{tpu_custom_call.1} parent=5 // pred_fallthru
        _
      %p292 = scmp.le.s32.totalorder 1, %s18
      %p293 = scmp.lt.s32.totalorder %s18, 3
      %p294 = pnand %p292, %p293
      %p295 = pneg %p294
      // Predicated region
      $region45: #{tpu_custom_call.1} parent=5 // pred_check
        _
      $region46: #{tpu_custom_call.1} parent=5 // pred_check_branch
        %297 = sbr.rel (%p294) target = $region48
      $region47: #{tpu_custom_call.1} parent=5 // pred_region
        %s298 = ssub.s32 %s18, 1
        %s299 = sand.u32 %s31, 1
        %s300 = scalar_lea.sflag [#allocation3], %s299
        %s301 = sand.u32 %s31, 1
        %s302 = smul.addr %s301, 392
        %s303 = scalar_lea.vmem [#allocation2], %s302
        // Predicated region
        $region49: #{tpu_custom_call.1} parent=47 // pred_check
          %p304 = pneg %p44
        $region50: #{tpu_custom_call.1} parent=47 // pred_check_branch
          %306 = sbr.rel (%p304) target = $region52
        $region51: #{tpu_custom_call.1} parent=47 // pred_region
          %307 = dma.done %s300, 6272
        $region52: #{tpu_custom_call.1} parent=47 // pred_fallthru
          _
        // Predicated region
        $region53: #{tpu_custom_call.1} parent=47 // pred_check
          %p308 = pneg %p65
        $region54: #{tpu_custom_call.1} parent=47 // pred_check_branch
          %310 = sbr.rel (%p308) target = $region56
        $region55: #{tpu_custom_call.1} parent=47 // pred_region
          %311 = dma.done [#allocation5], 12544
        $region56: #{tpu_custom_call.1} parent=47 // pred_fallthru
          _
        // Predicated region
        $region57: #{tpu_custom_call.1} parent=47 // pred_check
          %p312 = pneg %p107
        $region58: #{tpu_custom_call.1} parent=47 // pred_check_branch
          %314 = sbr.rel (%p312) target = $region60
        $region59: #{tpu_custom_call.1} parent=47 // pred_region
          %315 = dma.done [#allocation5], 2048
        $region60: #{tpu_custom_call.1} parent=47 // pred_fallthru
          _
        // Predicated region
        $region61: #{tpu_custom_call.1} parent=47 // pred_check
          %p316 = pneg %p149
        $region62: #{tpu_custom_call.1} parent=47 // pred_check_branch
          %318 = sbr.rel (%p316) target = $region64
        $region63: #{tpu_custom_call.1} parent=47 // pred_region
          %319 = dma.done [#allocation8], 1024
        $region64: #{tpu_custom_call.1} parent=47 // pred_fallthru
          _
        %s320 = sand.u32 %s31, 1
        %s321 = scalar_lea.sflag [#allocation3], %s320
        %s322 = sand.u32 %s31, 1
        %s323 = smul.addr %s322, 392
        %s324 = scalar_lea.vmem [#allocation2], %s323
        %p325 = pneg %p44
        %p326 = pneg %p41
        %p327 = pneg %p65
        %p328 = pneg %p62
        %p329 = pneg %p86
        %p330 = pneg %p83
        %p331 = pneg %p107
        %p332 = pneg %p104
        %p333 = pneg %p128
        %p334 = pneg %p125
        %p335 = pneg %p149
        %p336 = pneg %p146
        %p337 = pneg %p170
        %p338 = pneg %p167
        %p339 = pneg %p196
        %p340 = pneg %p193
        %s341 = sand.u32 %s183, 1
        %s342 = sand.u32 %s183, 1
        %s343 = smul.addr %s342, 56
        %s344 = scalar_lea.vmem [#allocation9], %s343
        %s345 = smul.u32 7, %s23
        %s346 = ssub.s32 13, %s345
        %p347 = scmp.lt.s32.totalorder %s346, 7
        %s348 = scalar_select %p347, %s346, 7
        %s349 = smul.u32 128, %s348
        %s350 = smul.u32 %s349, 7
        %s351 = smul.u32 7, %s23
        %s352 = ssub.s32 13, %s351
        %p353 = scmp.lt.s32.totalorder %s352, 7
        %s354 = scalar_select %p353, %s352, 7
        %s355 = smul.u32 128, %s354
        %v357 = vld [vmem:[%s303] sm:$0xff]
        %v358 = vld [vmem:[%s303 + $0x8] sm:$0xff]
        %v359 = vld [vmem:[%s303 + $0x10] sm:$0xff]
        %v360 = vld [vmem:[%s303 + $0x18] sm:$0xff]
        %v361 = vld [vmem:[%s303 + $0x20] sm:$0xff]
        %v362 = vld [vmem:[%s303 + $0x28] sm:$0xff]
        %v363 = vld [vmem:[%s303 + $0x30] sm:$0xff]
        %v364 = vld [vmem:[%s303 + $0x38] sm:$0xff]
        %v365 = vld [vmem:[%s303 + $0x40] sm:$0xff]
        %v366 = vld [vmem:[%s303 + $0x48] sm:$0xff]
        %v367 = vld [vmem:[%s303 + $0x50] sm:$0xff]
        %v368 = vld [vmem:[%s303 + $0x58] sm:$0xff]
        %v369 = vld [vmem:[%s303 + $0x60] sm:$0xff]
        %v370 = vld [vmem:[%s303 + $0x68] sm:$0xff]
        %v371 = vld [vmem:[%s303 + $0x70] sm:$0xff]
        %v372 = vld [vmem:[%s303 + $0x78] sm:$0xff]
        %v373 = vld [vmem:[%s303 + $0x80] sm:$0xff]
        %v374 = vld [vmem:[%s303 + $0x88] sm:$0xff]
        %v375 = vld [vmem:[%s303 + $0x90] sm:$0xff]
        %v376 = vld [vmem:[%s303 + $0x98] sm:$0xff]
        %v377 = vld [vmem:[%s303 + $0xa0] sm:$0xff]
        %v378 = vld [vmem:[%s303 + $0xa8] sm:$0xff]
        %v379 = vld [vmem:[%s303 + $0xb0] sm:$0xff]
        %v380 = vld [vmem:[%s303 + $0xb8] sm:$0xff]
        %v381 = vld [vmem:[%s303 + $0xc0] sm:$0xff]
        %v382 = vld [vmem:[%s303 + $0xc8] sm:$0xff]
        %v383 = vld [vmem:[%s303 + $0xd0] sm:$0xff]
        %v384 = vld [vmem:[%s303 + $0xd8] sm:$0xff]
        %v385 = vld [vmem:[%s303 + $0xe0] sm:$0xff]
        %v386 = vld [vmem:[%s303 + $0xe8] sm:$0xff]
        %v387 = vld [vmem:[%s303 + $0xf0] sm:$0xff]
        %v388 = vld [vmem:[%s303 + $0xf8] sm:$0xff]
        %v389 = vld [vmem:[%s303 + $0x100] sm:$0xff]
        %v390 = vld [vmem:[%s303 + $0x108] sm:$0xff]
        %v391 = vld [vmem:[%s303 + $0x110] sm:$0xff]
        %v392 = vld [vmem:[%s303 + $0x118] sm:$0xff]
        %v393 = vld [vmem:[%s303 + $0x120] sm:$0xff]
        %v394 = vld [vmem:[%s303 + $0x128] sm:$0xff]
        %v395 = vld [vmem:[%s303 + $0x130] sm:$0xff]
        %v396 = vld [vmem:[%s303 + $0x138] sm:$0xff]
        %v397 = vld [vmem:[%s303 + $0x140] sm:$0xff]
        %v398 = vld [vmem:[%s303 + $0x148] sm:$0xff]
        %v399 = vld [vmem:[%s303 + $0x150] sm:$0xff]
        %v400 = vld [vmem:[%s303 + $0x158] sm:$0xff]
        %v401 = vld [vmem:[%s303 + $0x160] sm:$0xff]
        %v402 = vld [vmem:[%s303 + $0x168] sm:$0xff]
        %v403 = vld [vmem:[%s303 + $0x170] sm:$0xff]
        %v404 = vld [vmem:[%s303 + $0x178] sm:$0xff]
        %v405 = vld [vmem:[%s303 + $0x180] sm:$0xff]
        %v406 = vpack.c.bf16 %v364, %v357
        %v407 = vpack.c.bf16 %v365, %v358
        %v408 = vpack.c.bf16 %v366, %v359
        %v409 = vpack.c.bf16 %v367, %v360
        %v410 = vpack.c.bf16 %v368, %v361
        %v411 = vpack.c.bf16 %v369, %v362
        %v412 = vpack.c.bf16 %v370, %v363
        %v413 = vpack.c.bf16 %v378, %v371
        %v414 = vpack.c.bf16 %v379, %v372
        %v415 = vpack.c.bf16 %v380, %v373
        %v416 = vpack.c.bf16 %v381, %v374
        %v417 = vpack.c.bf16 %v382, %v375
        %v418 = vpack.c.bf16 %v383, %v376
        %v419 = vpack.c.bf16 %v384, %v377
        %v420 = vpack.c.bf16 %v392, %v385
        %v421 = vpack.c.bf16 %v393, %v386
        %v422 = vpack.c.bf16 %v394, %v387
        %v423 = vpack.c.bf16 %v395, %v388
        %v424 = vpack.c.bf16 %v396, %v389
        %v425 = vpack.c.bf16 %v397, %v390
        %v426 = vpack.c.bf16 %v398, %v391
        %v427 = vpack.c.bf16 %v399, %v399
        %v428 = vpack.c.bf16 %v400, %v400
        %v429 = vpack.c.bf16 %v401, %v401
        %v430 = vpack.c.bf16 %v402, %v402
        %v431 = vpack.c.bf16 %v403, %v403
        %v432 = vpack.c.bf16 %v404, %v404
        %v433 = vpack.c.bf16 %v405, %v405
        %v434 = vld [vmem:[#allocation4] sm:$0xff]
        %v435 = vld [vmem:[#allocation4 + $0x8] sm:$0xff]
        %v436 = vld [vmem:[#allocation4 + $0x10] sm:$0xff]
        %v437 = vld [vmem:[#allocation4 + $0x18] sm:$0xff]
        %v438 = vld [vmem:[#allocation4 + $0x20] sm:$0xff]
        %v439 = vld [vmem:[#allocation4 + $0x28] sm:$0xff]
        %v440 = vld [vmem:[#allocation4 + $0x30] sm:$0xff]
        %v441 = vld [vmem:[#allocation4 + $0x38] sm:$0xff]
        %v442 = vld [vmem:[#allocation4 + $0x40] sm:$0xff]
        %v443 = vld [vmem:[#allocation4 + $0x48] sm:$0xff]
        %v444 = vld [vmem:[#allocation4 + $0x50] sm:$0xff]
        %v445 = vld [vmem:[#allocation4 + $0x58] sm:$0xff]
        %v446 = vld [vmem:[#allocation4 + $0x60] sm:$0xff]
        %v447 = vld [vmem:[#allocation4 + $0x68] sm:$0xff]
        %v448 = vld [vmem:[#allocation4 + $0x70] sm:$0xff]
        %v449 = vld [vmem:[#allocation4 + $0x78] sm:$0xff]
        %v450 = vld [vmem:[#allocation4 + $0x80] sm:$0xff]
        %v451 = vld [vmem:[#allocation4 + $0x88] sm:$0xff]
        %v452 = vld [vmem:[#allocation4 + $0x90] sm:$0xff]
        %v453 = vld [vmem:[#allocation4 + $0x98] sm:$0xff]
        %v454 = vld [vmem:[#allocation4 + $0xa0] sm:$0xff]
        %v455 = vld [vmem:[#allocation4 + $0xa8] sm:$0xff]
        %v456 = vld [vmem:[#allocation4 + $0xb0] sm:$0xff]
        %v457 = vld [vmem:[#allocation4 + $0xb8] sm:$0xff]
        %v458 = vld [vmem:[#allocation4 + $0xc0] sm:$0xff]
        %v459 = vld [vmem:[#allocation4 + $0xc8] sm:$0xff]
        %v460 = vld [vmem:[#allocation4 + $0xd0] sm:$0xff]
        %v461 = vld [vmem:[#allocation4 + $0xd8] sm:$0xff]
        %v462 = vld [vmem:[#allocation4 + $0xe0] sm:$0xff]
        %v463 = vld [vmem:[#allocation4 + $0xe8] sm:$0xff]
        %v464 = vld [vmem:[#allocation4 + $0xf0] sm:$0xff]
        %v465 = vld [vmem:[#allocation4 + $0xf8] sm:$0xff]
        %v466 = vld [vmem:[#allocation4 + $0x100] sm:$0xff]
        %v467 = vld [vmem:[#allocation4 + $0x108] sm:$0xff]
        %v468 = vld [vmem:[#allocation4 + $0x110] sm:$0xff]
        %v469 = vld [vmem:[#allocation4 + $0x118] sm:$0xff]
        %v470 = vld [vmem:[#allocation4 + $0x120] sm:$0xff]
        %v471 = vld [vmem:[#allocation4 + $0x128] sm:$0xff]
        %v472 = vld [vmem:[#allocation4 + $0x130] sm:$0xff]
        %v473 = vld [vmem:[#allocation4 + $0x138] sm:$0xff]
        %v474 = vld [vmem:[#allocation4 + $0x140] sm:$0xff]
        %v475 = vld [vmem:[#allocation4 + $0x148] sm:$0xff]
        %v476 = vld [vmem:[#allocation4 + $0x150] sm:$0xff]
        %v477 = vld [vmem:[#allocation4 + $0x158] sm:$0xff]
        %v478 = vld [vmem:[#allocation4 + $0x160] sm:$0xff]
        %v479 = vld [vmem:[#allocation4 + $0x168] sm:$0xff]
        %v480 = vld [vmem:[#allocation4 + $0x170] sm:$0xff]
        %v481 = vld [vmem:[#allocation4 + $0x178] sm:$0xff]
        %v482 = vld [vmem:[#allocation4 + $0x180] sm:$0xff]
        %v483 = vld [vmem:[#allocation4 + $0x188] sm:$0xff]
        %v484 = vld [vmem:[#allocation4 + $0x190] sm:$0xff]
        %v485 = vld [vmem:[#allocation4 + $0x198] sm:$0xff]
        %v486 = vld [vmem:[#allocation4 + $0x1a0] sm:$0xff]
        %v487 = vld [vmem:[#allocation4 + $0x1a8] sm:$0xff]
        %v488 = vld [vmem:[#allocation4 + $0x1b0] sm:$0xff]
        %v489 = vld [vmem:[#allocation4 + $0x1b8] sm:$0xff]
        %v490 = vld [vmem:[#allocation4 + $0x1c0] sm:$0xff]
        %v491 = vld [vmem:[#allocation4 + $0x1c8] sm:$0xff]
        %v492 = vld [vmem:[#allocation4 + $0x1d0] sm:$0xff]
        %v493 = vld [vmem:[#allocation4 + $0x1d8] sm:$0xff]
        %v494 = vld [vmem:[#allocation4 + $0x1e0] sm:$0xff]
        %v495 = vld [vmem:[#allocation4 + $0x1e8] sm:$0xff]
        %v496 = vld [vmem:[#allocation4 + $0x1f0] sm:$0xff]
        %v497 = vld [vmem:[#allocation4 + $0x1f8] sm:$0xff]
        %v498 = vld [vmem:[#allocation4 + $0x200] sm:$0xff]
        %v499 = vld [vmem:[#allocation4 + $0x208] sm:$0xff]
        %v500 = vld [vmem:[#allocation4 + $0x210] sm:$0xff]
        %v501 = vld [vmem:[#allocation4 + $0x218] sm:$0xff]
        %v502 = vld [vmem:[#allocation4 + $0x220] sm:$0xff]
        %v503 = vld [vmem:[#allocation4 + $0x228] sm:$0xff]
        %v504 = vld [vmem:[#allocation4 + $0x230] sm:$0xff]
        %v505 = vld [vmem:[#allocation4 + $0x238] sm:$0xff]
        %v506 = vld [vmem:[#allocation4 + $0x240] sm:$0xff]
        %v507 = vld [vmem:[#allocation4 + $0x248] sm:$0xff]
        %v508 = vld [vmem:[#allocation4 + $0x250] sm:$0xff]
        %v509 = vld [vmem:[#allocation4 + $0x258] sm:$0xff]
        %v510 = vld [vmem:[#allocation4 + $0x260] sm:$0xff]
        %v511 = vld [vmem:[#allocation4 + $0x268] sm:$0xff]
        %v512 = vld [vmem:[#allocation4 + $0x270] sm:$0xff]
        %v513 = vld [vmem:[#allocation4 + $0x278] sm:$0xff]
        %v514 = vld [vmem:[#allocation4 + $0x280] sm:$0xff]
        %v515 = vld [vmem:[#allocation4 + $0x288] sm:$0xff]
        %v516 = vld [vmem:[#allocation4 + $0x290] sm:$0xff]
        %v517 = vld [vmem:[#allocation4 + $0x298] sm:$0xff]
        %v518 = vld [vmem:[#allocation4 + $0x2a0] sm:$0xff]
        %v519 = vld [vmem:[#allocation4 + $0x2a8] sm:$0xff]
        %v520 = vld [vmem:[#allocation4 + $0x2b0] sm:$0xff]
        %v521 = vld [vmem:[#allocation4 + $0x2b8] sm:$0xff]
        %v522 = vld [vmem:[#allocation4 + $0x2c0] sm:$0xff]
        %v523 = vld [vmem:[#allocation4 + $0x2c8] sm:$0xff]
        %v524 = vld [vmem:[#allocation4 + $0x2d0] sm:$0xff]
        %v525 = vld [vmem:[#allocation4 + $0x2d8] sm:$0xff]
        %v526 = vld [vmem:[#allocation4 + $0x2e0] sm:$0xff]
        %v527 = vld [vmem:[#allocation4 + $0x2e8] sm:$0xff]
        %v528 = vld [vmem:[#allocation4 + $0x2f0] sm:$0xff]
        %v529 = vld [vmem:[#allocation4 + $0x2f8] sm:$0xff]
        %v530 = vld [vmem:[#allocation4 + $0x300] sm:$0xff]
        %v531 = vld [vmem:[#allocation4 + $0x308] sm:$0xff]
        %v532 = vld [vmem:[%s2] sm:$0x3]
        %v534 = vlaneseq
        %v535 = vshrl.u32 %v534, 7
        %v536 = vsub.s32 0, %v535
        %v537 = vrot.slane %v532, %v536
        %v538 = vlaneseq
        %v539 = vshrl.u32 %v538, 7
        %v540 = vsub.s32 1, %v539
        %v541 = vrot.slane %v532, %v540
        %v642 = vunpack.c.l.b16 %v434
        %v643 = vunpack.c.h.b16 %v434
        %v644 = vunpack.c.l.b16 %v435
        %v645 = vunpack.c.h.b16 %v435
        %v646 = vunpack.c.l.b16 %v436
        %v647 = vunpack.c.h.b16 %v436
        %v648 = vunpack.c.l.b16 %v437
        %v649 = vunpack.c.h.b16 %v437
        %v650 = vunpack.c.l.b16 %v438
        %v651 = vunpack.c.h.b16 %v438
        %v652 = vunpack.c.l.b16 %v439
        %v653 = vunpack.c.h.b16 %v439
        %v654 = vunpack.c.l.b16 %v440
        %v655 = vunpack.c.h.b16 %v440
        %v656 = vunpack.c.l.b16 %v441
        %v657 = vunpack.c.h.b16 %v441
        %v658 = vunpack.c.l.b16 %v442
        %v659 = vunpack.c.h.b16 %v442
        %v660 = vunpack.c.l.b16 %v443
        %v661 = vunpack.c.h.b16 %v443
        %v662 = vunpack.c.l.b16 %v444
        %v663 = vunpack.c.h.b16 %v444
        %v664 = vunpack.c.l.b16 %v445
        %v665 = vunpack.c.h.b16 %v445
        %v666 = vunpack.c.l.b16 %v446
        %v667 = vunpack.c.h.b16 %v446
        %v668 = vunpack.c.l.b16 %v447
        %v669 = vunpack.c.h.b16 %v447
        %v670 = vunpack.c.l.b16 %v448
        %v671 = vunpack.c.h.b16 %v448
        %v672 = vunpack.c.l.b16 %v449
        %v673 = vunpack.c.h.b16 %v449
        %v674 = vunpack.c.l.b16 %v450
        %v675 = vunpack.c.h.b16 %v450
        %v676 = vunpack.c.l.b16 %v451
        %v677 = vunpack.c.h.b16 %v451
        %v678 = vunpack.c.l.b16 %v452
        %v679 = vunpack.c.h.b16 %v452
        %v680 = vunpack.c.l.b16 %v453
        %v681 = vunpack.c.h.b16 %v453
        %v682 = vunpack.c.l.b16 %v454
        %v683 = vunpack.c.h.b16 %v454
        %v684 = vunpack.c.l.b16 %v455
        %v685 = vunpack.c.h.b16 %v455
        %v686 = vunpack.c.l.b16 %v456
        %v687 = vunpack.c.h.b16 %v456
        %v688 = vunpack.c.l.b16 %v457
        %v689 = vunpack.c.h.b16 %v457
        %v690 = vunpack.c.l.b16 %v458
        %v691 = vunpack.c.h.b16 %v458
        %v692 = vunpack.c.l.b16 %v459
        %v693 = vunpack.c.h.b16 %v459
        %v694 = vunpack.c.l.b16 %v460
        %v695 = vunpack.c.h.b16 %v460
        %v696 = vunpack.c.l.b16 %v461
        %v697 = vunpack.c.h.b16 %v461
        %v698 = vunpack.c.l.b16 %v462
        %v699 = vunpack.c.h.b16 %v462
        %v700 = vunpack.c.l.b16 %v463
        %v701 = vunpack.c.h.b16 %v463
        %v702 = vunpack.c.l.b16 %v464
        %v703 = vunpack.c.h.b16 %v464
        %v704 = vunpack.c.l.b16 %v465
        %v705 = vunpack.c.h.b16 %v465
        %v706 = vunpack.c.l.b16 %v466
        %v707 = vunpack.c.h.b16 %v466
        %v708 = vunpack.c.l.b16 %v467
        %v709 = vunpack.c.h.b16 %v467
        %v710 = vunpack.c.l.b16 %v468
        %v711 = vunpack.c.h.b16 %v468
        %v712 = vunpack.c.l.b16 %v469
        %v713 = vunpack.c.h.b16 %v469
        %v714 = vunpack.c.l.b16 %v470
        %v715 = vunpack.c.h.b16 %v470
        %v716 = vunpack.c.l.b16 %v471
        %v717 = vunpack.c.h.b16 %v471
        %v718 = vunpack.c.l.b16 %v472
        %v719 = vunpack.c.h.b16 %v472
        %v720 = vunpack.c.l.b16 %v473
        %v721 = vunpack.c.h.b16 %v473
        %v722 = vunpack.c.l.b16 %v474
        %v723 = vunpack.c.h.b16 %v474
        %v724 = vunpack.c.l.b16 %v475
        %v725 = vunpack.c.h.b16 %v475
        %v726 = vunpack.c.l.b16 %v476
        %v727 = vunpack.c.h.b16 %v476
        %v728 = vunpack.c.l.b16 %v477
        %v729 = vunpack.c.h.b16 %v477
        %v730 = vunpack.c.l.b16 %v478
        %v731 = vunpack.c.h.b16 %v478
        %v732 = vunpack.c.l.b16 %v479
        %v733 = vunpack.c.h.b16 %v479
        %v734 = vunpack.c.l.b16 %v480
        %v735 = vunpack.c.h.b16 %v480
        %v736 = vunpack.c.l.b16 %v481
        %v737 = vunpack.c.h.b16 %v481
        %v738 = vunpack.c.l.b16 %v482
        %v739 = vunpack.c.h.b16 %v482
        %v740 = vunpack.c.l.b16 %v483
        %v741 = vunpack.c.h.b16 %v483
        %v742 = vunpack.c.l.b16 %v484
        %v743 = vunpack.c.h.b16 %v484
        %v744 = vunpack.c.l.b16 %v485
        %v745 = vunpack.c.h.b16 %v485
        %v746 = vunpack.c.l.b16 %v486
        %v747 = vunpack.c.h.b16 %v486
        %v748 = vunpack.c.l.b16 %v487
        %v749 = vunpack.c.h.b16 %v487
        %v750 = vunpack.c.l.b16 %v488
        %v751 = vunpack.c.h.b16 %v488
        %v752 = vunpack.c.l.b16 %v489
        %v753 = vunpack.c.h.b16 %v489
        %v754 = vunpack.c.l.b16 %v490
        %v755 = vunpack.c.h.b16 %v490
        %v756 = vunpack.c.l.b16 %v491
        %v757 = vunpack.c.h.b16 %v491
        %v758 = vunpack.c.l.b16 %v492
        %v759 = vunpack.c.h.b16 %v492
        %v760 = vunpack.c.l.b16 %v493
        %v761 = vunpack.c.h.b16 %v493
        %v762 = vunpack.c.l.b16 %v494
        %v763 = vunpack.c.h.b16 %v494
        %v764 = vunpack.c.l.b16 %v495
        %v765 = vunpack.c.h.b16 %v495
        %v766 = vunpack.c.l.b16 %v496
        %v767 = vunpack.c.h.b16 %v496
        %v768 = vunpack.c.l.b16 %v497
        %v769 = vunpack.c.h.b16 %v497
        %v770 = vunpack.c.l.b16 %v498
        %v771 = vunpack.c.h.b16 %v498
        %v772 = vunpack.c.l.b16 %v499
        %v773 = vunpack.c.h.b16 %v499
        %v774 = vunpack.c.l.b16 %v500
        %v775 = vunpack.c.h.b16 %v500
        %v776 = vunpack.c.l.b16 %v501
        %v777 = vunpack.c.h.b16 %v501
        %v778 = vunpack.c.l.b16 %v502
        %v779 = vunpack.c.h.b16 %v502
        %v780 = vunpack.c.l.b16 %v503
        %v781 = vunpack.c.h.b16 %v503
        %v782 = vunpack.c.l.b16 %v504
        %v783 = vunpack.c.h.b16 %v504
        %v784 = vunpack.c.l.b16 %v505
        %v785 = vunpack.c.h.b16 %v505
        %v786 = vunpack.c.l.b16 %v506
        %v787 = vunpack.c.h.b16 %v506
        %v788 = vunpack.c.l.b16 %v507
        %v789 = vunpack.c.h.b16 %v507
        %v790 = vunpack.c.l.b16 %v508
        %v791 = vunpack.c.h.b16 %v508
        %v792 = vunpack.c.l.b16 %v509
        %v793 = vunpack.c.h.b16 %v509
        %v794 = vunpack.c.l.b16 %v510
        %v795 = vunpack.c.h.b16 %v510
        %v796 = vunpack.c.l.b16 %v511
        %v797 = vunpack.c.h.b16 %v511
        %v798 = vunpack.c.l.b16 %v512
        %v799 = vunpack.c.h.b16 %v512
        %v800 = vunpack.c.l.b16 %v513
        %v801 = vunpack.c.h.b16 %v513
        %v802 = vunpack.c.l.b16 %v514
        %v803 = vunpack.c.h.b16 %v514
        %v804 = vunpack.c.l.b16 %v515
        %v805 = vunpack.c.h.b16 %v515
        %v806 = vunpack.c.l.b16 %v516
        %v807 = vunpack.c.h.b16 %v516
        %v808 = vunpack.c.l.b16 %v517
        %v809 = vunpack.c.h.b16 %v517
        %v810 = vunpack.c.l.b16 %v518
        %v811 = vunpack.c.h.b16 %v518
        %v812 = vunpack.c.l.b16 %v519
        %v813 = vunpack.c.h.b16 %v519
        %v814 = vunpack.c.l.b16 %v520
        %v815 = vunpack.c.h.b16 %v520
        %v816 = vunpack.c.l.b16 %v521
        %v817 = vunpack.c.h.b16 %v521
        %v818 = vunpack.c.l.b16 %v522
        %v819 = vunpack.c.h.b16 %v522
        %v820 = vunpack.c.l.b16 %v523
        %v821 = vunpack.c.h.b16 %v523
        %v822 = vunpack.c.l.b16 %v524
        %v823 = vunpack.c.h.b16 %v524
        %v824 = vunpack.c.l.b16 %v525
        %v825 = vunpack.c.h.b16 %v525
        %v826 = vunpack.c.l.b16 %v526
        %v827 = vunpack.c.h.b16 %v526
        %v828 = vunpack.c.l.b16 %v527
        %v829 = vunpack.c.h.b16 %v527
        %v830 = vunpack.c.l.b16 %v528
        %v831 = vunpack.c.h.b16 %v528
        %v832 = vunpack.c.l.b16 %v529
        %v833 = vunpack.c.h.b16 %v529
        %v834 = vunpack.c.l.b16 %v530
        %v835 = vunpack.c.h.b16 %v530
        %v836 = vunpack.c.l.b16 %v531
        %v837 = vunpack.c.h.b16 %v531
        %v838 = vpack.c.b16 %v644, %v642
        %v839 = vpack.c.b16 %v645, %v643
        %v840 = vpack.c.b16 %v648, %v646
        %v841 = vpack.c.b16 %v649, %v647
        %v842 = vpack.c.b16 %v652, %v650
        %v843 = vpack.c.b16 %v653, %v651
        %v844 = vpack.c.b16 %v656, %v654
        %v845 = vpack.c.b16 %v657, %v655
        %v846 = vpack.c.b16 %v660, %v658
        %v847 = vpack.c.b16 %v661, %v659
        %v848 = vpack.c.b16 %v664, %v662
        %v849 = vpack.c.b16 %v665, %v663
        %v850 = vpack.c.b16 %v668, %v666
        %v851 = vpack.c.b16 %v669, %v667
        %v852 = vpack.c.b16 %v672, %v670
        %v853 = vpack.c.b16 %v673, %v671
        %v854 = vpack.c.b16 %v676, %v674
        %v855 = vpack.c.b16 %v677, %v675
        %v856 = vpack.c.b16 %v680, %v678
        %v857 = vpack.c.b16 %v681, %v679
        %v858 = vpack.c.b16 %v684, %v682
        %v859 = vpack.c.b16 %v685, %v683
        %v860 = vpack.c.b16 %v688, %v686
        %v861 = vpack.c.b16 %v689, %v687
        %v862 = vpack.c.b16 %v692, %v690
        %v863 = vpack.c.b16 %v693, %v691
        %v864 = vpack.c.b16 %v696, %v694
        %v865 = vpack.c.b16 %v697, %v695
        %v866 = vpack.c.b16 %v700, %v698
        %v867 = vpack.c.b16 %v701, %v699
        %v868 = vpack.c.b16 %v704, %v702
        %v869 = vpack.c.b16 %v705, %v703
        %v870 = vpack.c.b16 %v708, %v706
        %v871 = vpack.c.b16 %v709, %v707
        %v872 = vpack.c.b16 %v712, %v710
        %v873 = vpack.c.b16 %v713, %v711
        %v874 = vpack.c.b16 %v716, %v714
        %v875 = vpack.c.b16 %v717, %v715
        %v876 = vpack.c.b16 %v720, %v718
        %v877 = vpack.c.b16 %v721, %v719
        %v878 = vpack.c.b16 %v724, %v722
        %v879 = vpack.c.b16 %v725, %v723
        %v880 = vpack.c.b16 %v728, %v726
        %v881 = vpack.c.b16 %v729, %v727
        %v882 = vpack.c.b16 %v732, %v730
        %v883 = vpack.c.b16 %v733, %v731
        %v884 = vpack.c.b16 %v736, %v734
        %v885 = vpack.c.b16 %v737, %v735
        %v886 = vpack.c.b16 %v740, %v738
        %v887 = vpack.c.b16 %v741, %v739
        %v888 = vpack.c.b16 %v744, %v742
        %v889 = vpack.c.b16 %v745, %v743
        %v890 = vpack.c.b16 %v748, %v746
        %v891 = vpack.c.b16 %v749, %v747
        %v892 = vpack.c.b16 %v752, %v750
        %v893 = vpack.c.b16 %v753, %v751
        %v894 = vpack.c.b16 %v756, %v754
        %v895 = vpack.c.b16 %v757, %v755
        %v896 = vpack.c.b16 %v760, %v758
        %v897 = vpack.c.b16 %v761, %v759
        %v898 = vpack.c.b16 %v764, %v762
        %v899 = vpack.c.b16 %v765, %v763
        %v900 = vpack.c.b16 %v768, %v766
        %v901 = vpack.c.b16 %v769, %v767
        %v902 = vpack.c.b16 %v772, %v770
        %v903 = vpack.c.b16 %v773, %v771
        %v904 = vpack.c.b16 %v776, %v774
        %v905 = vpack.c.b16 %v777, %v775
        %v906 = vpack.c.b16 %v780, %v778
        %v907 = vpack.c.b16 %v781, %v779
        %v908 = vpack.c.b16 %v784, %v782
        %v909 = vpack.c.b16 %v785, %v783
        %v910 = vpack.c.b16 %v788, %v786
        %v911 = vpack.c.b16 %v789, %v787
        %v912 = vpack.c.b16 %v792, %v790
        %v913 = vpack.c.b16 %v793, %v791
        %v914 = vpack.c.b16 %v796, %v794
        %v915 = vpack.c.b16 %v797, %v795
        %v916 = vpack.c.b16 %v800, %v798
        %v917 = vpack.c.b16 %v801, %v799
        %v918 = vpack.c.b16 %v804, %v802
        %v919 = vpack.c.b16 %v805, %v803
        %v920 = vpack.c.b16 %v808, %v806
        %v921 = vpack.c.b16 %v809, %v807
        %v922 = vpack.c.b16 %v812, %v810
        %v923 = vpack.c.b16 %v813, %v811
        %v924 = vpack.c.b16 %v816, %v814
        %v925 = vpack.c.b16 %v817, %v815
        %v926 = vpack.c.b16 %v820, %v818
        %v927 = vpack.c.b16 %v821, %v819
        %v928 = vpack.c.b16 %v824, %v822
        %v929 = vpack.c.b16 %v825, %v823
        %v930 = vpack.c.b16 %v828, %v826
        %v931 = vpack.c.b16 %v829, %v827
        %v932 = vpack.c.b16 %v832, %v830
        %v933 = vpack.c.b16 %v833, %v831
        %v934 = vpack.c.b16 %v836, %v834
        %v935 = vpack.c.b16 %v837, %v835
        %vm1034 = vcmask 130048
        %v1036 = vsel %vm1034, %v412, 0
        %v1039 = vsel %vm1034, %v419, 0
        %v1042 = vsel %vm1034, %v426, 0
        %v1045 = vsel %vm1034, %v433, 0
        %1047 = vmatprep.subr.bf16.mxu0 %v839
        %1048 = vmatpush1.bf16.msra.mxu0 %v838
        %1049 = vmatprep.subr.bf16.mxu0 %v841
        %1050 = vmatpush1.bf16.msra.mxu0 %v840
        %1051 = vmatprep.subr.bf16.mxu0 %v843
        %1052 = vmatpush1.bf16.msra.mxu0 %v842
        %1053 = vmatprep.subr.bf16.mxu0 %v845
        %1054 = vmatpush1.bf16.msra.mxu0 %v844
        %1055 = vmatprep.subr.bf16.mxu0 %v847
        %1056 = vmatpush1.bf16.msra.mxu0 %v846
        %1057 = vmatprep.subr.bf16.mxu0 %v849
        %1058 = vmatpush1.bf16.msra.mxu0 %v848
        %1059 = vmatprep.subr.bf16.mxu0 %v851
        %1060 = vmatpush1.bf16.msra.mxu0 %v850
        %1061 = vmatprep.subr.bf16.mxu0 %v853
        %1062 = vmatpush1.bf16.msra.mxu0 %v852
        %1063 = vmatprep.subr.bf16.mxu0 %v855
        %1064 = vmatpush1.bf16.msra.mxu0 %v854
        %1065 = vmatprep.subr.bf16.mxu0 %v857
        %1066 = vmatpush1.bf16.msra.mxu0 %v856
        %1067 = vmatprep.subr.bf16.mxu0 %v859
        %1068 = vmatpush1.bf16.msra.mxu0 %v858
        %1069 = vmatprep.subr.bf16.mxu0 %v861
        %1070 = vmatpush1.bf16.msra.mxu0 %v860
        %1071 = vmatprep.subr.bf16.mxu0 %v863
        %1072 = vmatpush1.bf16.msra.mxu0 %v862
        %1073 = vmatprep.subr.bf16.mxu0 %v865
        %1074 = vmatpush1.bf16.msra.mxu0 %v864
        %1075 = vmatprep.subr.bf16.mxu0 %v867
        %1076 = vmatpush1.bf16.msra.mxu0 %v866
        %1077 = vmatprep.subr.bf16.mxu0 %v869
        %1078 = vmatpush1.bf16.msra.mxu0 %v868
        %1079 = vmatprep.mubr.bf16.mxu0 %v407
        %1080 = vmatmul.mubr.bf16.gmra.mrb[0].mxu0 %v406
        %v1081 = vpop.f32.mrb[0].mxu0
        %v1082 = vadd.f32 %v537, %v1081
        %v1083 = vpop.f32.mrb[0].mxu0
        %v1084 = vadd.f32 %v541, %v1083
        %v1085 = vpop.f32.mrb[0].mxu0
        %v1086 = vadd.f32 %v537, %v1085
        %v1087 = vpop.f32.mrb[0].mxu0
        %v1088 = vadd.f32 %v541, %v1087
        %1089 = vmatprep.mubr.bf16.mxu0 %v414
        %1090 = vmatmul.mubr.bf16.gmra.mrb[0].mxu0 %v413
        %v1091 = vpop.f32.mrb[0].mxu0
        %v1092 = vadd.f32 %v537, %v1091
        %v1093 = vpop.f32.mrb[0].mxu0
        %v1094 = vadd.f32 %v541, %v1093
        %v1095 = vpop.f32.mrb[0].mxu0
        %v1096 = vadd.f32 %v537, %v1095
        %v1097 = vpop.f32.mrb[0].mxu0
        %v1098 = vadd.f32 %v541, %v1097
        %1099 = vmatprep.mubr.bf16.mxu0 %v421
        %1100 = vmatmul.mubr.bf16.gmra.mrb[0].mxu0 %v420
        %v1101 = vpop.f32.mrb[0].mxu0
        %v1102 = vadd.f32 %v537, %v1101
        %v1103 = vpop.f32.mrb[0].mxu0
        %v1104 = vadd.f32 %v541, %v1103
        %v1105 = vpop.f32.mrb[0].mxu0
        %v1106 = vadd.f32 %v537, %v1105
        %v1107 = vpop.f32.mrb[0].mxu0
        %v1108 = vadd.f32 %v541, %v1107
        %1109 = vmatprep.mubr.bf16.mxu0 %v428
        %1110 = vmatmul.mubr.bf16.gmra.mrb[0].mxu0 %v427
        %v1111 = vpop.f32.mrb[0].mxu0
        %v1112 = vadd.f32 %v537, %v1111
        %v1113 = vpop.f32.mrb[0].mxu0
        %v1114 = vadd.f32 %v541, %v1113
        %v1115 = vpop.f32.mrb[0].mxu0
        %v1116 = vpop.f32.mrb[0].mxu0
        %1117 = vdwg.mxu0
        %1118 = vmatprep.subr.bf16.mxu0 %v871
        %1119 = vmatpush1.bf16.msra.mxu0 %v870
        %1120 = vmatprep.subr.bf16.mxu0 %v873
        %1121 = vmatpush1.bf16.msra.mxu0 %v872
        %1122 = vmatprep.subr.bf16.mxu0 %v875
        %1123 = vmatpush1.bf16.msra.mxu0 %v874
        %1124 = vmatprep.subr.bf16.mxu0 %v877
        %1125 = vmatpush1.bf16.msra.mxu0 %v876
        %1126 = vmatprep.subr.bf16.mxu0 %v879
        %1127 = vmatpush1.bf16.msra.mxu0 %v878
        %1128 = vmatprep.subr.bf16.mxu0 %v881
        %1129 = vmatpush1.bf16.msra.mxu0 %v880
        %1130 = vmatprep.subr.bf16.mxu0 %v883
        %1131 = vmatpush1.bf16.msra.mxu0 %v882
        %1132 = vmatprep.subr.bf16.mxu0 %v885
        %1133 = vmatpush1.bf16.msra.mxu0 %v884
        %1134 = vmatprep.subr.bf16.mxu0 %v887
        %1135 = vmatpush1.bf16.msra.mxu0 %v886
        %1136 = vmatprep.subr.bf16.mxu0 %v889
        %1137 = vmatpush1.bf16.msra.mxu0 %v888
        %1138 = vmatprep.subr.bf16.mxu0 %v891
        %1139 = vmatpush1.bf16.msra.mxu0 %v890
        %1140 = vmatprep.subr.bf16.mxu0 %v893
        %1141 = vmatpush1.bf16.msra.mxu0 %v892
        %1142 = vmatprep.subr.bf16.mxu0 %v895
        %1143 = vmatpush1.bf16.msra.mxu0 %v894
        %1144 = vmatprep.subr.bf16.mxu0 %v897
        %1145 = vmatpush1.bf16.msra.mxu0 %v896
        %1146 = vmatprep.subr.bf16.mxu0 %v899
        %1147 = vmatpush1.bf16.msra.mxu0 %v898
        %1148 = vmatprep.subr.bf16.mxu0 %v901
        %1149 = vmatpush1.bf16.msra.mxu0 %v900
        %1150 = vmatprep.mubr.bf16.mxu0 %v409
        %1151 = vmatmul.mubr.bf16.gmra.mrb[0].mxu0 %v408
        %v1152 = vpop.f32.mrb[0].mxu0
        %v1153 = vadd.f32 %v1082, %v1152
        %v1154 = vpop.f32.mrb[0].mxu0
        %v1155 = vadd.f32 %v1084, %v1154
        %v1156 = vpop.f32.mrb[0].mxu0
        %v1157 = vadd.f32 %v1086, %v1156
        %v1158 = vpop.f32.mrb[0].mxu0
        %v1159 = vadd.f32 %v1088, %v1158
        %1160 = vmatprep.mubr.bf16.mxu0 %v416
        %1161 = vmatmul.mubr.bf16.gmra.mrb[0].mxu0 %v415
        %v1162 = vpop.f32.mrb[0].mxu0
        %v1163 = vadd.f32 %v1092, %v1162
        %v1164 = vpop.f32.mrb[0].mxu0
        %v1165 = vadd.f32 %v1094, %v1164
        %v1166 = vpop.f32.mrb[0].mxu0
        %v1167 = vadd.f32 %v1096, %v1166
        %v1168 = vpop.f32.mrb[0].mxu0
        %v1169 = vadd.f32 %v1098, %v1168
        %1170 = vmatprep.mubr.bf16.mxu0 %v423
        %1171 = vmatmul.mubr.bf16.gmra.mrb[0].mxu0 %v422
        %v1172 = vpop.f32.mrb[0].mxu0
        %v1173 = vadd.f32 %v1102, %v1172
        %v1174 = vpop.f32.mrb[0].mxu0
        %v1175 = vadd.f32 %v1104, %v1174
        %v1176 = vpop.f32.mrb[0].mxu0
        %v1177 = vadd.f32 %v1106, %v1176
        %v1178 = vpop.f32.mrb[0].mxu0
        %v1179 = vadd.f32 %v1108, %v1178
        %1180 = vmatprep.mubr.bf16.mxu0 %v430
        %1181 = vmatmul.mubr.bf16.gmra.mrb[0].mxu0 %v429
        %v1182 = vpop.f32.mrb[0].mxu0
        %v1183 = vadd.f32 %v1112, %v1182
        %v1184 = vpop.f32.mrb[0].mxu0
        %v1185 = vadd.f32 %v1114, %v1184
        %v1186 = vpop.f32.mrb[0].mxu0
        %v1187 = vpop.f32.mrb[0].mxu0
        %1188 = vdwg.mxu0
        %1189 = vmatprep.subr.bf16.mxu0 %v903
        %1190 = vmatpush1.bf16.msra.mxu0 %v902
        %1191 = vmatprep.subr.bf16.mxu0 %v905
        %1192 = vmatpush1.bf16.msra.mxu0 %v904
        %1193 = vmatprep.subr.bf16.mxu0 %v907
        %1194 = vmatpush1.bf16.msra.mxu0 %v906
        %1195 = vmatprep.subr.bf16.mxu0 %v909
        %1196 = vmatpush1.bf16.msra.mxu0 %v908
        %1197 = vmatprep.subr.bf16.mxu0 %v911
        %1198 = vmatpush1.bf16.msra.mxu0 %v910
        %1199 = vmatprep.subr.bf16.mxu0 %v913
        %1200 = vmatpush1.bf16.msra.mxu0 %v912
        %1201 = vmatprep.subr.bf16.mxu0 %v915
        %1202 = vmatpush1.bf16.msra.mxu0 %v914
        %1203 = vmatprep.subr.bf16.mxu0 %v917
        %1204 = vmatpush1.bf16.msra.mxu0 %v916
        %1205 = vmatprep.subr.bf16.mxu0 %v919
        %1206 = vmatpush1.bf16.msra.mxu0 %v918
        %1207 = vmatprep.subr.bf16.mxu0 %v921
        %1208 = vmatpush1.bf16.msra.mxu0 %v920
        %1209 = vmatprep.subr.bf16.mxu0 %v923
        %1210 = vmatpush1.bf16.msra.mxu0 %v922
        %1211 = vmatprep.subr.bf16.mxu0 %v925
        %1212 = vmatpush1.bf16.msra.mxu0 %v924
        %1213 = vmatprep.subr.bf16.mxu0 %v927
        %1214 = vmatpush1.bf16.msra.mxu0 %v926
        %1215 = vmatprep.subr.bf16.mxu0 %v929
        %1216 = vmatpush1.bf16.msra.mxu0 %v928
        %1217 = vmatprep.subr.bf16.mxu0 %v931
        %1218 = vmatpush1.bf16.msra.mxu0 %v930
        %1219 = vmatprep.subr.bf16.mxu0 %v933
        %1220 = vmatpush1.bf16.msra.mxu0 %v932
        %1221 = vmatprep.mubr.bf16.mxu0 %v411
        %1222 = vmatmul.mubr.bf16.gmra.mrb[0].mxu0 %v410
        %v1223 = vpop.f32.mrb[0].mxu0
        %v1224 = vadd.f32 %v1153, %v1223
        %v1225 = vpop.f32.mrb[0].mxu0
        %v1226 = vadd.f32 %v1155, %v1225
        %v1227 = vpop.f32.mrb[0].mxu0
        %v1228 = vadd.f32 %v1157, %v1227
        %v1229 = vpop.f32.mrb[0].mxu0
        %v1230 = vadd.f32 %v1159, %v1229
        %1231 = vmatprep.mubr.bf16.mxu0 %v418
        %1232 = vmatmul.mubr.bf16.gmra.mrb[0].mxu0 %v417
        %v1233 = vpop.f32.mrb[0].mxu0
        %v1234 = vadd.f32 %v1163, %v1233
        %v1235 = vpop.f32.mrb[0].mxu0
        %v1236 = vadd.f32 %v1165, %v1235
        %v1237 = vpop.f32.mrb[0].mxu0
        %v1238 = vadd.f32 %v1167, %v1237
        %v1239 = vpop.f32.mrb[0].mxu0
        %v1240 = vadd.f32 %v1169, %v1239
        %1241 = vmatprep.mubr.bf16.mxu0 %v425
        %1242 = vmatmul.mubr.bf16.gmra.mrb[0].mxu0 %v424
        %v1243 = vpop.f32.mrb[0].mxu0
        %v1244 = vadd.f32 %v1173, %v1243
        %v1245 = vpop.f32.mrb[0].mxu0
        %v1246 = vadd.f32 %v1175, %v1245
        %v1247 = vpop.f32.mrb[0].mxu0
        %v1248 = vadd.f32 %v1177, %v1247
        %v1249 = vpop.f32.mrb[0].mxu0
        %v1250 = vadd.f32 %v1179, %v1249
        %1251 = vmatprep.mubr.bf16.mxu0 %v432
        %1252 = vmatmul.mubr.bf16.gmra.mrb[0].mxu0 %v431
        %v1253 = vpop.f32.mrb[0].mxu0
        %v1254 = vadd.f32 %v1183, %v1253
        %v1255 = vpop.f32.mrb[0].mxu0
        %v1256 = vadd.f32 %v1185, %v1255
        %v1257 = vpop.f32.mrb[0].mxu0
        %v1258 = vpop.f32.mrb[0].mxu0
        %1259 = vdwg.mxu0
        %1260 = vmatprep.subr.bf16.mxu0 %v935
        %1261 = vmatpush1.bf16.msra.mxu0 %v934
        %1262 = vmatprep.subr.bf16.mxu0 0
        %1263 = vmatpush1.bf16.msra.mxu0 0
        %1264 = vmatprep.subr.bf16.mxu0 0
        %1265 = vmatpush1.bf16.msra.mxu0 0
        %1266 = vmatprep.subr.bf16.mxu0 0
        %1267 = vmatpush1.bf16.msra.mxu0 0
        %1268 = vmatprep.subr.bf16.mxu0 0
        %1269 = vmatpush1.bf16.msra.mxu0 0
        %1270 = vmatprep.subr.bf16.mxu0 0
        %1271 = vmatpush1.bf16.msra.mxu0 0
        %1272 = vmatprep.subr.bf16.mxu0 0
        %1273 = vmatpush1.bf16.msra.mxu0 0
        %1274 = vmatprep.subr.bf16.mxu0 0
        %1275 = vmatpush1.bf16.msra.mxu0 0
        %1276 = vmatprep.subr.bf16.mxu0 0
        %1277 = vmatpush1.bf16.msra.mxu0 0
        %1278 = vmatprep.subr.bf16.mxu0 0
        %1279 = vmatpush1.bf16.msra.mxu0 0
        %1280 = vmatprep.subr.bf16.mxu0 0
        %1281 = vmatpush1.bf16.msra.mxu0 0
        %1282 = vmatprep.subr.bf16.mxu0 0
        %1283 = vmatpush1.bf16.msra.mxu0 0
        %1284 = vmatprep.subr.bf16.mxu0 0
        %1285 = vmatpush1.bf16.msra.mxu0 0
        %1286 = vmatprep.subr.bf16.mxu0 0
        %1287 = vmatpush1.bf16.msra.mxu0 0
        %1288 = vmatprep.subr.bf16.mxu0 0
        %1289 = vmatpush1.bf16.msra.mxu0 0
        %1290 = vmatprep.subr.bf16.mxu0 0
        %1291 = vmatpush1.bf16.msra.mxu0 0
        %1292 = vmatprep.mubr.bf16.mxu0 0
        %1293 = vmatmul.mubr.bf16.gmra.mrb[0].mxu0 %v1036
        %v1294 = vpop.f32.mrb[0].mxu0
        %v1295 = vadd.f32 %v1224, %v1294
        %v1296 = vpop.f32.mrb[0].mxu0
        %v1297 = vadd.f32 %v1226, %v1296
        %v1298 = vpop.f32.mrb[0].mxu0
        %v1299 = vadd.f32 %v1228, %v1298
        %v1300 = vpop.f32.mrb[0].mxu0
        %v1301 = vadd.f32 %v1230, %v1300
        %1302 = vmatprep.mubr.bf16.mxu0 0
        %1303 = vmatmul.mubr.bf16.gmra.mrb[0].mxu0 %v1039
        %v1304 = vpop.f32.mrb[0].mxu0
        %v1305 = vadd.f32 %v1234, %v1304
        %v1306 = vpop.f32.mrb[0].mxu0
        %v1307 = vadd.f32 %v1236, %v1306
        %v1308 = vpop.f32.mrb[0].mxu0
        %v1309 = vadd.f32 %v1238, %v1308
        %v1310 = vpop.f32.mrb[0].mxu0
        %v1311 = vadd.f32 %v1240, %v1310
        %1312 = vmatprep.mubr.bf16.mxu0 0
        %1313 = vmatmul.mubr.bf16.gmra.mrb[0].mxu0 %v1042
        %v1314 = vpop.f32.mrb[0].mxu0
        %v1315 = vadd.f32 %v1244, %v1314
        %v1316 = vpop.f32.mrb[0].mxu0
        %v1317 = vadd.f32 %v1246, %v1316
        %v1318 = vpop.f32.mrb[0].mxu0
        %v1319 = vadd.f32 %v1248, %v1318
        %v1320 = vpop.f32.mrb[0].mxu0
        %v1321 = vadd.f32 %v1250, %v1320
        %1322 = vmatprep.mubr.bf16.mxu0 0
        %1323 = vmatmul.mubr.bf16.gmra.mrb[0].mxu0 %v1045
        %v1324 = vpop.f32.mrb[0].mxu0
        %v1325 = vadd.f32 %v1254, %v1324
        %v1326 = vpop.f32.mrb[0].mxu0
        %v1327 = vadd.f32 %v1256, %v1326
        %v1328 = vpop.f32.mrb[0].mxu0
        %v1329 = vpop.f32.mrb[0].mxu0
        %1330 = vdwg.mxu0
        %v1331 = vmax.f32 %v1295, 0.0
        %v1332 = vmax.f32 %v1297, 0.0
        %v1333 = vmax.f32 %v1299, 0.0
        %v1334 = vmax.f32 %v1301, 0.0
        %v1335 = vmax.f32 %v1305, 0.0
        %v1336 = vmax.f32 %v1307, 0.0
        %v1337 = vmax.f32 %v1309, 0.0
        %v1338 = vmax.f32 %v1311, 0.0
        %v1339 = vmax.f32 %v1315, 0.0
        %v1340 = vmax.f32 %v1317, 0.0
        %v1341 = vmax.f32 %v1319, 0.0
        %v1342 = vmax.f32 %v1321, 0.0
        %v1343 = vmax.f32 %v1325, 0.0
        %v1344 = vmax.f32 %v1327, 0.0
        %v1345 = vpack.c.bf16 %v1333, %v1331
        %v1346 = vpack.c.bf16 %v1334, %v1332
        %v1347 = vpack.c.bf16 %v1337, %v1335
        %v1348 = vpack.c.bf16 %v1338, %v1336
        %v1349 = vpack.c.bf16 %v1341, %v1339
        %v1350 = vpack.c.bf16 %v1342, %v1340
        %v1351 = vpack.c.bf16 %v1343, %v1343
        %v1352 = vpack.c.bf16 %v1344, %v1344
        %v1353 = vld [vmem:[#allocation6] sm:$0xf]
        %v1354 = vld [vmem:[#allocation6 + $0x4] sm:$0xf]
        %v1355 = vld [vmem:[#allocation6 + $0x8] sm:$0xf]
        %v1356 = vld [vmem:[#allocation6 + $0xc] sm:$0xf]
        %v1357 = vld [vmem:[#allocation6 + $0x10] sm:$0xf]
        %v1358 = vld [vmem:[#allocation6 + $0x14] sm:$0xf]
        %v1359 = vld [vmem:[#allocation6 + $0x18] sm:$0xf]
        %v1360 = vld [vmem:[#allocation6 + $0x1c] sm:$0xf]
        %v1361 = vld [vmem:[#allocation6 + $0x20] sm:$0xf]
        %v1362 = vld [vmem:[#allocation6 + $0x24] sm:$0xf]
        %v1363 = vld [vmem:[#allocation6 + $0x28] sm:$0xf]
        %v1364 = vld [vmem:[#allocation6 + $0x2c] sm:$0xf]
        %v1365 = vld [vmem:[#allocation6 + $0x30] sm:$0xf]
        %v1366 = vld [vmem:[#allocation6 + $0x34] sm:$0xf]
        %v1367 = vld [vmem:[#allocation6 + $0x38] sm:$0xf]
        %v1368 = vld [vmem:[#allocation6 + $0x3c] sm:$0xf]
        %v1369 = vld [vmem:[#allocation6 + $0x40] sm:$0xf]
        %v1370 = vld [vmem:[#allocation6 + $0x44] sm:$0xf]
        %v1371 = vld [vmem:[#allocation6 + $0x48] sm:$0xf]
        %v1372 = vld [vmem:[#allocation6 + $0x4c] sm:$0xf]
        %v1373 = vld [vmem:[#allocation6 + $0x50] sm:$0xf]
        %v1374 = vld [vmem:[#allocation6 + $0x54] sm:$0xf]
        %v1375 = vld [vmem:[#allocation6 + $0x58] sm:$0xf]
        %v1376 = vld [vmem:[#allocation6 + $0x5c] sm:$0xf]
        %v1377 = vld [vmem:[#allocation6 + $0x60] sm:$0xf]
        %v1378 = vld [vmem:[#allocation6 + $0x64] sm:$0xf]
        %v1379 = vld [vmem:[#allocation6 + $0x68] sm:$0xf]
        %v1380 = vld [vmem:[#allocation6 + $0x6c] sm:$0xf]
        %v1381 = vld [vmem:[#allocation6 + $0x70] sm:$0xf]
        %v1382 = vld [vmem:[#allocation6 + $0x74] sm:$0xf]
        %v1383 = vld [vmem:[#allocation6 + $0x78] sm:$0xf]
        %v1384 = vld [vmem:[#allocation6 + $0x7c] sm:$0xf]
        %v1385 = vld [vmem:[%s4] sm:$0x1]
        %v1387 = vlaneseq
        %v1388 = vshrl.u32 %v1387, 7
        %v1389 = vsub.s32 0, %v1388
        %v1390 = vrot.slane %v1385, %v1389
        %v1424 = vunpack.c.l.b16 %v1353
        %v1425 = vunpack.c.l.b16 %v1354
        %v1426 = vunpack.c.l.b16 %v1355
        %v1427 = vunpack.c.l.b16 %v1356
        %v1428 = vunpack.c.l.b16 %v1357
        %v1429 = vunpack.c.l.b16 %v1358
        %v1430 = vunpack.c.l.b16 %v1359
        %v1431 = vunpack.c.l.b16 %v1360
        %v1432 = vunpack.c.l.b16 %v1361
        %v1433 = vunpack.c.l.b16 %v1362
        %v1434 = vunpack.c.l.b16 %v1363
        %v1435 = vunpack.c.l.b16 %v1364
        %v1436 = vunpack.c.l.b16 %v1365
        %v1437 = vunpack.c.l.b16 %v1366
        %v1438 = vunpack.c.l.b16 %v1367
        %v1439 = vunpack.c.l.b16 %v1368
        %v1440 = vunpack.c.l.b16 %v1369
        %v1441 = vunpack.c.l.b16 %v1370
        %v1442 = vunpack.c.l.b16 %v1371
        %v1443 = vunpack.c.l.b16 %v1372
        %v1444 = vunpack.c.l.b16 %v1373
        %v1445 = vunpack.c.l.b16 %v1374
        %v1446 = vunpack.c.l.b16 %v1375
        %v1447 = vunpack.c.l.b16 %v1376
        %v1448 = vunpack.c.l.b16 %v1377
        %v1449 = vunpack.c.l.b16 %v1378
        %v1450 = vunpack.c.l.b16 %v1379
        %v1451 = vunpack.c.l.b16 %v1380
        %v1452 = vunpack.c.l.b16 %v1381
        %v1453 = vunpack.c.l.b16 %v1382
        %v1454 = vunpack.c.l.b16 %v1383
        %v1455 = vunpack.c.l.b16 %v1384
        %v1456 = vpack.c.b16 %v1425, %v1424
        %v1457 = vpack.c.b16 %v1427, %v1426
        %v1458 = vpack.c.b16 %v1429, %v1428
        %v1459 = vpack.c.b16 %v1431, %v1430
        %v1460 = vpack.c.b16 %v1433, %v1432
        %v1461 = vpack.c.b16 %v1435, %v1434
        %v1462 = vpack.c.b16 %v1437, %v1436
        %v1463 = vpack.c.b16 %v1439, %v1438
        %v1464 = vpack.c.b16 %v1441, %v1440
        %v1465 = vpack.c.b16 %v1443, %v1442
        %v1466 = vpack.c.b16 %v1445, %v1444
        %v1467 = vpack.c.b16 %v1447, %v1446
        %v1468 = vpack.c.b16 %v1449, %v1448
        %v1469 = vpack.c.b16 %v1451, %v1450
        %v1470 = vpack.c.b16 %v1453, %v1452
        %v1471 = vpack.c.b16 %v1455, %v1454
        %1488 = vmatprep.subr.bf16.mxu0 0
        %1489 = vmatpush1.bf16.msra.mxu0 %v1456
        %1490 = vmatprep.subr.bf16.mxu0 0
        %1491 = vmatpush1.bf16.msra.mxu0 %v1457
        %1492 = vmatprep.subr.bf16.mxu0 0
        %1493 = vmatpush1.bf16.msra.mxu0 %v1458
        %1494 = vmatprep.subr.bf16.mxu0 0
        %1495 = vmatpush1.bf16.msra.mxu0 %v1459
        %1496 = vmatprep.subr.bf16.mxu0 0
        %1497 = vmatpush1.bf16.msra.mxu0 %v1460
        %1498 = vmatprep.subr.bf16.mxu0 0
        %1499 = vmatpush1.bf16.msra.mxu0 %v1461
        %1500 = vmatprep.subr.bf16.mxu0 0
        %1501 = vmatpush1.bf16.msra.mxu0 %v1462
        %1502 = vmatprep.subr.bf16.mxu0 0
        %1503 = vmatpush1.bf16.msra.mxu0 %v1463
        %1504 = vmatprep.subr.bf16.mxu0 0
        %1505 = vmatpush1.bf16.msra.mxu0 %v1464
        %1506 = vmatprep.subr.bf16.mxu0 0
        %1507 = vmatpush1.bf16.msra.mxu0 %v1465
        %1508 = vmatprep.subr.bf16.mxu0 0
        %1509 = vmatpush1.bf16.msra.mxu0 %v1466
        %1510 = vmatprep.subr.bf16.mxu0 0
        %1511 = vmatpush1.bf16.msra.mxu0 %v1467
        %1512 = vmatprep.subr.bf16.mxu0 0
        %1513 = vmatpush1.bf16.msra.mxu0 %v1468
        %1514 = vmatprep.subr.bf16.mxu0 0
        %1515 = vmatpush1.bf16.msra.mxu0 %v1469
        %1516 = vmatprep.subr.bf16.mxu0 0
        %1517 = vmatpush1.bf16.msra.mxu0 %v1470
        %1518 = vmatprep.subr.bf16.mxu0 0
        %1519 = vmatpush1.bf16.msra.mxu0 %v1471
        %1520 = vmatprep.mubr.bf16.mxu0 %v1346
        %1521 = vmatmul.mubr.bf16.gmra.mrb[0].mxu0 %v1345
        %v1522 = vpop.f32.mrb[0].mxu0
        %v1523 = vadd.f32 %v1390, %v1522
        %v1524 = vpop.f32.mrb[0].mxu0
        %v1525 = vpop.f32.mrb[0].mxu0
        %v1526 = vadd.f32 %v1390, %v1525
        %v1527 = vpop.f32.mrb[0].mxu0
        %1528 = vmatprep.mubr.bf16.mxu0 %v1348
        %1529 = vmatmul.mubr.bf16.gmra.mrb[0].mxu0 %v1347
        %v1530 = vpop.f32.mrb[0].mxu0
        %v1531 = vadd.f32 %v1390, %v1530
        %v1532 = vpop.f32.mrb[0].mxu0
        %v1533 = vpop.f32.mrb[0].mxu0
        %v1534 = vadd.f32 %v1390, %v1533
        %v1535 = vpop.f32.mrb[0].mxu0
        %1536 = vmatprep.mubr.bf16.mxu0 %v1350
        %1537 = vmatmul.mubr.bf16.gmra.mrb[0].mxu0 %v1349
        %v1538 = vpop.f32.mrb[0].mxu0
        %v1539 = vadd.f32 %v1390, %v1538
        %v1540 = vpop.f32.mrb[0].mxu0
        %v1541 = vpop.f32.mrb[0].mxu0
        %v1542 = vadd.f32 %v1390, %v1541
        %v1543 = vpop.f32.mrb[0].mxu0
        %1544 = vmatprep.mubr.bf16.mxu0 %v1352
        %1545 = vmatmul.mubr.bf16.gmra.mrb[0].mxu0 %v1351
        %v1546 = vpop.f32.mrb[0].mxu0
        %v1547 = vadd.f32 %v1390, %v1546
        %v1548 = vpop.f32.mrb[0].mxu0
        %v1549 = vpop.f32.mrb[0].mxu0
        %v1550 = vpop.f32.mrb[0].mxu0
        %1551 = vdwg.mxu0
        %v1552 = vmax.f32 %v1523, 0.0
        %v1553 = vmax.f32 %v1526, 0.0
        %v1554 = vmax.f32 %v1531, 0.0
        %v1555 = vmax.f32 %v1534, 0.0
        %v1556 = vmax.f32 %v1539, 0.0
        %v1557 = vmax.f32 %v1542, 0.0
        %v1558 = vmax.f32 %v1547, 0.0
        %v1559 = vpack.c.bf16 %v1553, %v1552
        %v1560 = vpack.c.bf16 %v1555, %v1554
        %v1561 = vpack.c.bf16 %v1557, %v1556
        %v1562 = vpack.c.bf16 %v1558, %v1558
        %v1563 = vld [vmem:[#allocation7] sm:$0xf]
        %v1564 = vld [vmem:[#allocation7 + $0x4] sm:$0xf]
        %v1565 = vld [vmem:[#allocation7 + $0x8] sm:$0xf]
        %v1566 = vld [vmem:[#allocation7 + $0xc] sm:$0xf]
        %v1567 = vld [vmem:[#allocation7 + $0x10] sm:$0xf]
        %v1568 = vld [vmem:[#allocation7 + $0x14] sm:$0xf]
        %v1569 = vld [vmem:[#allocation7 + $0x18] sm:$0xf]
        %v1570 = vld [vmem:[#allocation7 + $0x1c] sm:$0xf]
        %v1571 = vld [vmem:[#allocation7 + $0x20] sm:$0xf]
        %v1572 = vld [vmem:[#allocation7 + $0x24] sm:$0xf]
        %v1573 = vld [vmem:[#allocation7 + $0x28] sm:$0xf]
        %v1574 = vld [vmem:[#allocation7 + $0x2c] sm:$0xf]
        %v1575 = vld [vmem:[#allocation7 + $0x30] sm:$0xf]
        %v1576 = vld [vmem:[#allocation7 + $0x34] sm:$0xf]
        %v1577 = vld [vmem:[#allocation7 + $0x38] sm:$0xf]
        %v1578 = vld [vmem:[#allocation7 + $0x3c] sm:$0xf]
        %v1579 = vld [vmem:[%s6] sm:$0x1]
        %v1581 = vlaneseq
        %v1582 = vshrl.u32 %v1581, 7
        %v1583 = vsub.s32 0, %v1582
        %v1584 = vrot.slane %v1579, %v1583
        %v1602 = vunpack.c.l.b16 %v1563
        %v1603 = vunpack.c.l.b16 %v1564
        %v1604 = vunpack.c.l.b16 %v1565
        %v1605 = vunpack.c.l.b16 %v1566
        %v1606 = vunpack.c.l.b16 %v1567
        %v1607 = vunpack.c.l.b16 %v1568
        %v1608 = vunpack.c.l.b16 %v1569
        %v1609 = vunpack.c.l.b16 %v1570
        %v1610 = vunpack.c.l.b16 %v1571
        %v1611 = vunpack.c.l.b16 %v1572
        %v1612 = vunpack.c.l.b16 %v1573
        %v1613 = vunpack.c.l.b16 %v1574
        %v1614 = vunpack.c.l.b16 %v1575
        %v1615 = vunpack.c.l.b16 %v1576
        %v1616 = vunpack.c.l.b16 %v1577
        %v1617 = vunpack.c.l.b16 %v1578
        %v1618 = vpack.c.b16 %v1603, %v1602
        %v1619 = vpack.c.b16 %v1605, %v1604
        %v1620 = vpack.c.b16 %v1607, %v1606
        %v1621 = vpack.c.b16 %v1609, %v1608
        %v1622 = vpack.c.b16 %v1611, %v1610
        %v1623 = vpack.c.b16 %v1613, %v1612
        %v1624 = vpack.c.b16 %v1615, %v1614
        %v1625 = vpack.c.b16 %v1617, %v1616
        %1634 = vmatprep.subr.bf16.mxu0 0
        %1635 = vmatpush1.bf16.msra.mxu0 %v1618
        %1636 = vmatprep.subr.bf16.mxu0 0
        %1637 = vmatpush1.bf16.msra.mxu0 %v1619
        %1638 = vmatprep.subr.bf16.mxu0 0
        %1639 = vmatpush1.bf16.msra.mxu0 %v1620
        %1640 = vmatprep.subr.bf16.mxu0 0
        %1641 = vmatpush1.bf16.msra.mxu0 %v1621
        %1642 = vmatprep.subr.bf16.mxu0 0
        %1643 = vmatpush1.bf16.msra.mxu0 %v1622
        %1644 = vmatprep.subr.bf16.mxu0 0
        %1645 = vmatpush1.bf16.msra.mxu0 %v1623
        %1646 = vmatprep.subr.bf16.mxu0 0
        %1647 = vmatpush1.bf16.msra.mxu0 %v1624
        %1648 = vmatprep.subr.bf16.mxu0 0
        %1649 = vmatpush1.bf16.msra.mxu0 %v1625
        %1650 = vmatprep.subr.bf16.mxu0 0
        %1651 = vmatpush1.bf16.msra.mxu0 0
        %1652 = vmatprep.subr.bf16.mxu0 0
        %1653 = vmatpush1.bf16.msra.mxu0 0
        %1654 = vmatprep.subr.bf16.mxu0 0
        %1655 = vmatpush1.bf16.msra.mxu0 0
        %1656 = vmatprep.subr.bf16.mxu0 0
        %1657 = vmatpush1.bf16.msra.mxu0 0
        %1658 = vmatprep.subr.bf16.mxu0 0
        %1659 = vmatpush1.bf16.msra.mxu0 0
        %1660 = vmatprep.subr.bf16.mxu0 0
        %1661 = vmatpush1.bf16.msra.mxu0 0
        %1662 = vmatprep.subr.bf16.mxu0 0
        %1663 = vmatpush1.bf16.msra.mxu0 0
        %1664 = vmatprep.subr.bf16.mxu0 0
        %1665 = vmatpush1.bf16.msra.mxu0 0
        %1666 = vmatprep.mubr.bf16.mxu0 0
        %1667 = vmatmul.mubr.bf16.gmra.mrb[0].mxu0 %v1559
        %v1668 = vpop.f32.mrb[0].mxu0
        %v1669 = vadd.f32 %v1584, %v1668
        %v1670 = vpop.f32.mrb[0].mxu0
        %v1671 = vpop.f32.mrb[0].mxu0
        %v1672 = vadd.f32 %v1584, %v1671
        %v1673 = vpop.f32.mrb[0].mxu0
        %1674 = vmatprep.mubr.bf16.mxu0 0
        %1675 = vmatmul.mubr.bf16.gmra.mrb[0].mxu0 %v1560
        %v1676 = vpop.f32.mrb[0].mxu0
        %v1677 = vadd.f32 %v1584, %v1676
        %v1678 = vpop.f32.mrb[0].mxu0
        %v1679 = vpop.f32.mrb[0].mxu0
        %v1680 = vadd.f32 %v1584, %v1679
        %v1681 = vpop.f32.mrb[0].mxu0
        %1682 = vmatprep.mubr.bf16.mxu0 0
        %1683 = vmatmul.mubr.bf16.gmra.mrb[0].mxu0 %v1561
        %v1684 = vpop.f32.mrb[0].mxu0
        %v1685 = vadd.f32 %v1584, %v1684
        %v1686 = vpop.f32.mrb[0].mxu0
        %v1687 = vpop.f32.mrb[0].mxu0
        %v1688 = vadd.f32 %v1584, %v1687
        %v1689 = vpop.f32.mrb[0].mxu0
        %1690 = vmatprep.mubr.bf16.mxu0 0
        %1691 = vmatmul.mubr.bf16.gmra.mrb[0].mxu0 %v1562
        %v1692 = vpop.f32.mrb[0].mxu0
        %v1693 = vadd.f32 %v1584, %v1692
        %v1694 = vpop.f32.mrb[0].mxu0
        %v1695 = vpop.f32.mrb[0].mxu0
        %v1696 = vpop.f32.mrb[0].mxu0
        %1697 = vdwg.mxu0
        %v1698 = vlaneseq
        %v1699 = vand.u32 %v1698, 127
        %vm1700 = vcmp.lt.s32.totalorder %v1699, 10
        %v1701 = vsel %vm1700, %v1669, -inf
        %v1702 = vsel %vm1700, %v1672, -inf
        %v1703 = vsel %vm1700, %v1677, -inf
        %v1704 = vsel %vm1700, %v1680, -inf
        %v1705 = vsel %vm1700, %v1685, -inf
        %v1706 = vsel %vm1700, %v1688, -inf
        %v1707 = vsel %vm1700, %v1693, -inf
        %1708 = vmax.xlane.f32.xlu0 %v1701
        %v1709 = vpop.xlane.xlu0 %1708
        %1710 = vmax.xlane.f32.xlu0 %v1702
        %v1711 = vpop.xlane.xlu0 %1710
        %1712 = vmax.xlane.f32.xlu0 %v1703
        %v1713 = vpop.xlane.xlu0 %1712
        %1714 = vmax.xlane.f32.xlu0 %v1704
        %v1715 = vpop.xlane.xlu0 %1714
        %1716 = vmax.xlane.f32.xlu0 %v1705
        %v1717 = vpop.xlane.xlu0 %1716
        %1718 = vmax.xlane.f32.xlu0 %v1706
        %v1719 = vpop.xlane.xlu0 %1718
        %1720 = vmax.xlane.f32.xlu0 %v1707
        %v1721 = vpop.xlane.xlu0 %1720
        %v1722 = vsub.f32 %v1701, %v1709
        %v1723 = vsub.f32 %v1702, %v1711
        %v1724 = vsub.f32 %v1703, %v1713
        %v1725 = vsub.f32 %v1704, %v1715
        %v1726 = vsub.f32 %v1705, %v1717
        %v1727 = vsub.f32 %v1706, %v1719
        %v1728 = vsub.f32 %v1707, %v1721
        %v1729 = vmul.f32 %v1722, 1.442695
        %v1730 = vpow.pop %v1729
        %v1731 = vmul.f32 %v1723, 1.442695
        %v1732 = vpow.pop %v1731
        %v1733 = vmul.f32 %v1724, 1.442695
        %v1734 = vpow.pop %v1733
        %v1735 = vmul.f32 %v1725, 1.442695
        %v1736 = vpow.pop %v1735
        %v1737 = vmul.f32 %v1726, 1.442695
        %v1738 = vpow.pop %v1737
        %v1739 = vmul.f32 %v1727, 1.442695
        %v1740 = vpow.pop %v1739
        %v1741 = vmul.f32 %v1728, 1.442695
        %v1742 = vpow.pop %v1741
        %1743 = vadd.xlane.f32.xlu0 %v1730
        %v1744 = vpop.xlane.xlu0 %1743
        %1745 = vadd.xlane.f32.xlu0 %v1732
        %v1746 = vpop.xlane.xlu0 %1745
        %1747 = vadd.xlane.f32.xlu0 %v1734
        %v1748 = vpop.xlane.xlu0 %1747
        %1749 = vadd.xlane.f32.xlu0 %v1736
        %v1750 = vpop.xlane.xlu0 %1749
        %1751 = vadd.xlane.f32.xlu0 %v1738
        %v1752 = vpop.xlane.xlu0 %1751
        %1753 = vadd.xlane.f32.xlu0 %v1740
        %v1754 = vpop.xlane.xlu0 %1753
        %1755 = vadd.xlane.f32.xlu0 %v1742
        %v1756 = vpop.xlane.xlu0 %1755
        %v1757 = vrcp.pop %v1744
        %v1758 = vrcp.pop %v1746
        %v1759 = vrcp.pop %v1748
        %v1760 = vrcp.pop %v1750
        %v1761 = vrcp.pop %v1752
        %v1762 = vrcp.pop %v1754
        %v1763 = vrcp.pop %v1756
        %v1764 = vmul.f32 %v1744, %v1757
        %v1765 = vmul.f32 %v1746, %v1758
        %v1766 = vmul.f32 %v1748, %v1759
        %v1767 = vmul.f32 %v1750, %v1760
        %v1768 = vmul.f32 %v1752, %v1761
        %v1769 = vmul.f32 %v1754, %v1762
        %v1770 = vmul.f32 %v1756, %v1763
        %v1771 = vsub.f32 2.0, %v1764
        %v1772 = vsub.f32 2.0, %v1765
        %v1773 = vsub.f32 2.0, %v1766
        %v1774 = vsub.f32 2.0, %v1767
        %v1775 = vsub.f32 2.0, %v1768
        %v1776 = vsub.f32 2.0, %v1769
        %v1777 = vsub.f32 2.0, %v1770
        %v1778 = vmul.f32 %v1757, %v1771
        %v1779 = vmul.f32 %v1758, %v1772
        %v1780 = vmul.f32 %v1759, %v1773
        %v1781 = vmul.f32 %v1760, %v1774
        %v1782 = vmul.f32 %v1761, %v1775
        %v1783 = vmul.f32 %v1762, %v1776
        %v1784 = vmul.f32 %v1763, %v1777
        %v1785 = vmul.f32 %v1730, %v1778
        %v1786 = vmul.f32 %v1732, %v1779
        %v1787 = vmul.f32 %v1734, %v1780
        %v1788 = vmul.f32 %v1736, %v1781
        %v1789 = vmul.f32 %v1738, %v1782
        %v1790 = vmul.f32 %v1740, %v1783
        %v1791 = vmul.f32 %v1742, %v1784
        %vm1792 = vcmask 80896
        %1793 = vst.msk [vmem:[%s344] sm:$0xff] %vm1792, %v1785
        %1794 = vst.msk [vmem:[%s344 + $0x8] sm:$0xff] %vm1792, %v1786
        %1795 = vst.msk [vmem:[%s344 + $0x10] sm:$0xff] %vm1792, %v1787
        %1796 = vst.msk [vmem:[%s344 + $0x18] sm:$0xff] %vm1792, %v1788
        %1797 = vst.msk [vmem:[%s344 + $0x20] sm:$0xff] %vm1792, %v1789
        %1798 = vst.msk [vmem:[%s344 + $0x28] sm:$0xff] %vm1792, %v1790
        %1799 = vst.msk [vmem:[%s344 + $0x30] sm:$0xff] %vm1792, %v1791
        %s1800 = sand.u32 %s183, 1
        %s1801 = sand.u32 %s183, 1
        %s1802 = smul.addr %s1801, 56
        %s1803 = scalar_lea.vmem [#allocation9], %s1802
        // Predicated region
        $region65: #{tpu_custom_call.1} parent=47 // pred_check
          %p1804 = pneg %p193
        $region66: #{tpu_custom_call.1} parent=47 // pred_check_branch
          %1806 = sbr.rel (%p1804) target = $region68
        $region67: #{tpu_custom_call.1} parent=47 // pred_region
          %s1807 = smul.u32 7, %s23
          %s1808 = ssub.s32 13, %s1807
          %p1809 = scmp.lt.s32.totalorder %s1808, 7
          %s1810 = scalar_select %p1809, %s1808, 7
          %s1811 = smul.u32 128, %s1810
          %p1812 = scmp.ne.s32.totalorder 0, %s1811
          %s1813 = smul.addr %s1807, 8
          %s1814 = scalar_lea.vmem %s7, %s1813
          // Predicated region
          $region69: #{tpu_custom_call.1} parent=67 // pred_check
            %p1815 = pneg %p1812
          $region70: #{tpu_custom_call.1} parent=67 // pred_check_branch
            %1817 = sbr.rel (%p1815) target = $region72
          $region71: #{tpu_custom_call.1} parent=67 // pred_region
            // Predicated region
            $region73: #{tpu_custom_call.1} parent=71 // pred_check
              _
            $region74: #{tpu_custom_call.1} parent=71 // pred_check_branch
              %1819 = sbr.rel (0) target = $region76
            $region75: #{tpu_custom_call.1} parent=71 // pred_region
              // Predicated region
              $region95: #{tpu_custom_call.1} parent=75 // pred_check
                _
              $region96: #{tpu_custom_call.1} parent=75 // pred_check_branch
                %1881 = sbr.rel (0) target = $region98
              $region97: #{tpu_custom_call.1} parent=75 // pred_region
                %s1882 = sdiv.u32.pop %s1810, 7
                %s1883 = srem.u32.pop %s1810, 7
                // While loop
                $region99: #{tpu_custom_call.1} parent=97 // loop_pre_header
                  _
                $region100: #{tpu_custom_call.1} parent=97 // loop_header
                  %s1885 = sphi 0, %s1887
                  %p1886 = scmp.ge.s32.totalorder %s1885, %s1882
                  %s1890 = sphi 0, %s1909
                  %s1891 = sphi %s1803, %s1912
                  %s1892 = sphi %s1814, %s1913
                $region101: #{tpu_custom_call.1} parent=97 // loop_header_branch
                  %1889 = sbr.rel (%p1886) target = $region105
                $region102: #{tpu_custom_call.1} parent=97 // loop_body
                  %v1893 = vld [vmem:[%s1891] sm:$0xff]
                  %1894 = vst [vmem:[%s1892] sm:$0xff] %v1893
                  %v1895 = vld [vmem:[%s1891 + $0x8] sm:$0xff]
                  %1896 = vst [vmem:[%s1892 + $0x8] sm:$0xff] %v1895
                  %v1897 = vld [vmem:[%s1891 + $0x10] sm:$0xff]
                  %1898 = vst [vmem:[%s1892 + $0x10] sm:$0xff] %v1897
                  %v1899 = vld [vmem:[%s1891 + $0x18] sm:$0xff]
                  %1900 = vst [vmem:[%s1892 + $0x18] sm:$0xff] %v1899
                  %v1901 = vld [vmem:[%s1891 + $0x20] sm:$0xff]
                  %1902 = vst [vmem:[%s1892 + $0x20] sm:$0xff] %v1901
                  %v1903 = vld [vmem:[%s1891 + $0x28] sm:$0xff]
                  %1904 = vst [vmem:[%s1892 + $0x28] sm:$0xff] %v1903
                  %v1905 = vld [vmem:[%s1891 + $0x30] sm:$0xff]
                  %1906 = vst [vmem:[%s1892 + $0x30] sm:$0xff] %v1905
                  %s1907 = sadd.s32 1, %s1890
                  %p1908 = scmp.ge.s32.totalorder %s1907, %s1882
                  %s1909 = scalar_select %p1908, 0, %s1907
                  %s1910 = smul.u32 %s1909, 56
                  %s1911 = smul.u32 %s1909, 56
                  %s1912 = scalar_lea.vmem %s1803, %s1910 [#allocation9]
                  %s1913 = scalar_lea.vmem %s1814, %s1911
                $region103: #{tpu_custom_call.1} parent=97 // loop_footer
                  %s1887 = sadd.s32 %s1885, 1
                $region104: #{tpu_custom_call.1} parent=97 // loop_footer_branch
                  %1884 = sbr.rel target = $region100
                $region105: #{tpu_custom_call.1} parent=97 // loop_exit
                  _
                %s1914 = sdiv.u32.pop %s1810, 7
                %s1915 = srem.u32.pop %s1810, 7
                %s1916 = smul.u32 %s1914, 7
                %s1917 = smul.u32 8, %s1916
                %s1918 = scalar_lea.vmem %s1803, %s1917 [#allocation9]
                %s1919 = smul.u32 8, %s1916
                %s1920 = scalar_lea.vmem %s1814, %s1919
                // While loop
                $region106: #{tpu_custom_call.1} parent=97 // loop_pre_header
                  _
                $region107: #{tpu_custom_call.1} parent=97 // loop_header
                  %s1922 = sphi 0, %s1924
                  %p1923 = scmp.ge.s32.totalorder %s1922, %s1915
                  %s1927 = sphi 0, %s1934
                  %s1928 = sphi %s1918, %s1937
                  %s1929 = sphi %s1920, %s1938
                $region108: #{tpu_custom_call.1} parent=97 // loop_header_branch
                  %1926 = sbr.rel (%p1923) target = $region112
                $region109: #{tpu_custom_call.1} parent=97 // loop_body
                  %v1930 = vld [vmem:[%s1928] sm:$0xff]
                  %1931 = vst [vmem:[%s1929] sm:$0xff] %v1930
                  %s1932 = sadd.s32 1, %s1927
                  %p1933 = scmp.ge.s32.totalorder %s1932, %s1915
                  %s1934 = scalar_select %p1933, 0, %s1932
                  %s1935 = smul.u32 %s1934, 8
                  %s1936 = smul.u32 %s1934, 8
                  %s1937 = scalar_lea.vmem %s1918, %s1935 [#allocation9]
                  %s1938 = scalar_lea.vmem %s1920, %s1936
                $region110: #{tpu_custom_call.1} parent=97 // loop_footer
                  %s1924 = sadd.s32 %s1922, 1
                $region111: #{tpu_custom_call.1} parent=97 // loop_footer_branch
                  %1921 = sbr.rel target = $region107
                $region112: #{tpu_custom_call.1} parent=97 // loop_exit
                  _
              $region98: #{tpu_custom_call.1} parent=75 // pred_fallthru
                _
              // Predicated region
              $region113: #{tpu_custom_call.1} parent=75 // pred_check
                _
              $region114: #{tpu_custom_call.1} parent=75 // pred_check_branch
                %1940 = sbr.rel target = $region116
              $region115: #{tpu_custom_call.1} parent=75 // pred_region
                _
              $region116: #{tpu_custom_call.1} parent=75 // pred_fallthru
                _
            $region76: #{tpu_custom_call.1} parent=71 // pred_fallthru
              _
            // Predicated region
            $region77: #{tpu_custom_call.1} parent=71 // pred_check
              _
            $region78: #{tpu_custom_call.1} parent=71 // pred_check_branch
              %1821 = sbr.rel target = $region80
            $region79: #{tpu_custom_call.1} parent=71 // pred_region
              %s1823 = sdiv.u32.pop %s1810, 7
              %s1824 = srem.u32.pop %s1810, 7
              // While loop
              $region81: #{tpu_custom_call.1} parent=79 // loop_pre_header
                _
              $region82: #{tpu_custom_call.1} parent=79 // loop_header
                %s1826 = sphi 0, %s1828
                %p1827 = scmp.ge.s32.totalorder %s1826, %s1823
                %s1831 = sphi 0, %s1850
                %s1832 = sphi %s1803, %s1853
                %s1833 = sphi %s1814, %s1854
              $region83: #{tpu_custom_call.1} parent=79 // loop_header_branch
                %1830 = sbr.rel (%p1827) target = $region87
              $region84: #{tpu_custom_call.1} parent=79 // loop_body
                %v1834 = vld [vmem:[%s1832] sm:$0xff]
                %1835 = vst [vmem:[%s1833] sm:$0xff] %v1834
                %v1836 = vld [vmem:[%s1832 + $0x8] sm:$0xff]
                %1837 = vst [vmem:[%s1833 + $0x8] sm:$0xff] %v1836
                %v1838 = vld [vmem:[%s1832 + $0x10] sm:$0xff]
                %1839 = vst [vmem:[%s1833 + $0x10] sm:$0xff] %v1838
                %v1840 = vld [vmem:[%s1832 + $0x18] sm:$0xff]
                %1841 = vst [vmem:[%s1833 + $0x18] sm:$0xff] %v1840
                %v1842 = vld [vmem:[%s1832 + $0x20] sm:$0xff]
                %1843 = vst [vmem:[%s1833 + $0x20] sm:$0xff] %v1842
                %v1844 = vld [vmem:[%s1832 + $0x28] sm:$0xff]
                %1845 = vst [vmem:[%s1833 + $0x28] sm:$0xff] %v1844
                %v1846 = vld [vmem:[%s1832 + $0x30] sm:$0xff]
                %1847 = vst [vmem:[%s1833 + $0x30] sm:$0xff] %v1846
                %s1848 = sadd.s32 1, %s1831
                %p1849 = scmp.ge.s32.totalorder %s1848, %s1823
                %s1850 = scalar_select %p1849, 0, %s1848
                %s1851 = smul.u32 %s1850, 56
                %s1852 = smul.u32 %s1850, 56
                %s1853 = scalar_lea.vmem %s1803, %s1851 [#allocation9]
                %s1854 = scalar_lea.vmem %s1814, %s1852
              $region85: #{tpu_custom_call.1} parent=79 // loop_footer
                %s1828 = sadd.s32 %s1826, 1
              $region86: #{tpu_custom_call.1} parent=79 // loop_footer_branch
                %1825 = sbr.rel target = $region82
              $region87: #{tpu_custom_call.1} parent=79 // loop_exit
                _
              %s1855 = sdiv.u32.pop %s1810, 7
              %s1856 = srem.u32.pop %s1810, 7
              %s1857 = smul.u32 %s1855, 7
              %s1858 = smul.u32 8, %s1857
              %s1859 = scalar_lea.vmem %s1803, %s1858 [#allocation9]
              %s1860 = smul.u32 8, %s1857
              %s1861 = scalar_lea.vmem %s1814, %s1860
              // While loop
              $region88: #{tpu_custom_call.1} parent=79 // loop_pre_header
                _
              $region89: #{tpu_custom_call.1} parent=79 // loop_header
                %s1863 = sphi 0, %s1865
                %p1864 = scmp.ge.s32.totalorder %s1863, %s1856
                %s1868 = sphi 0, %s1875
                %s1869 = sphi %s1859, %s1878
                %s1870 = sphi %s1861, %s1879
              $region90: #{tpu_custom_call.1} parent=79 // loop_header_branch
                %1867 = sbr.rel (%p1864) target = $region94
              $region91: #{tpu_custom_call.1} parent=79 // loop_body
                %v1871 = vld [vmem:[%s1869] sm:$0xff]
                %1872 = vst [vmem:[%s1870] sm:$0xff] %v1871
                %s1873 = sadd.s32 1, %s1868
                %p1874 = scmp.ge.s32.totalorder %s1873, %s1856
                %s1875 = scalar_select %p1874, 0, %s1873
                %s1876 = smul.u32 %s1875, 8
                %s1877 = smul.u32 %s1875, 8
                %s1878 = scalar_lea.vmem %s1859, %s1876 [#allocation9]
                %s1879 = scalar_lea.vmem %s1861, %s1877
              $region92: #{tpu_custom_call.1} parent=79 // loop_footer
                %s1865 = sadd.s32 %s1863, 1
              $region93: #{tpu_custom_call.1} parent=79 // loop_footer_branch
                %1862 = sbr.rel target = $region89
              $region94: #{tpu_custom_call.1} parent=79 // loop_exit
                _
            $region80: #{tpu_custom_call.1} parent=71 // pred_fallthru
              _
          $region72: #{tpu_custom_call.1} parent=67 // pred_fallthru
            _
          %1941 = vnop
        $region68: #{tpu_custom_call.1} parent=47 // pred_fallthru
          _
      $region48: #{tpu_custom_call.1} parent=5 // pred_fallthru
        _
      %p1942 = scmp.le.s32.totalorder 2, %s18
      // Predicated region
      $region117: #{tpu_custom_call.1} parent=5 // pred_check
        %p1943 = pneg %p1942
      $region118: #{tpu_custom_call.1} parent=5 // pred_check_branch
        %1945 = sbr.rel (%p1943) target = $region120
      $region119: #{tpu_custom_call.1} parent=5 // pred_region
        %s1946 = ssub.s32 %s18, 2
        // Predicated region
        $region121: #{tpu_custom_call.1} parent=119 // pred_check
          %p1947 = pneg %p199
        $region122: #{tpu_custom_call.1} parent=119 // pred_check_branch
          %1949 = sbr.rel (%p1947) target = $region124
        $region123: #{tpu_custom_call.1} parent=119 // pred_region
          %s1950 = sand.u32 %s184, 1
          %s1951 = sand.u32 %s184, 1
          %s1952 = smul.addr %s1951, 56
          %s1953 = scalar_lea.vmem [#allocation9], %s1952
        $region124: #{tpu_custom_call.1} parent=119 // pred_fallthru
          _
      $region120: #{tpu_custom_call.1} parent=5 // pred_fallthru
        _
    $region6: #{tpu_custom_call.1} parent=1 // loop_footer
      %s22 = sadd.s32 1, %s18
    $region7: #{tpu_custom_call.1} parent=1 // loop_footer_branch
      %17 = sbr.rel target = $region3
    $region8: #{tpu_custom_call.1} parent=1 // loop_exit
      _
    %1954 = vsyncpa [#allocation3], 1
    %s1955 = scalar_lea.sflag [#allocation3], 1
    %1956 = vsyncpa %s1955, 1
    %1957 = vsyncpa [#allocation5], 1
    %1958 = vsyncpa [#allocation8], 1

</llo_original>
